<compile_context>
chip_gen: v7x
topology: tpu7x:2x2x1
jax: 0.10.0
libtpu: 0.0.40
codegen_flags: <defaults>
</compile_context>

<pallas_src>
from functools import partial
import math

import numpy as np
import jax
import jax.numpy as jnp
from jax import lax
from jax.experimental import pallas as pl
from jax.experimental.pallas import tpu as pltpu


def _attention_kernel(x_ref, wqkv_ref, bqkv_ref, wproj_ref, bproj_ref,
                      out_ref, attn_ref, *, num_heads, scale):
    # One batch element per grid step.
    x = x_ref[0].astype(jnp.float32)                       # (N, C)
    n, c = x.shape
    dh = c // num_heads

    # QKV projection: a single MXU matmul, reused by every head.
    qkv = jnp.dot(x, wqkv_ref[...],
                  preferred_element_type=jnp.float32) + bqkv_ref[...]   # (N, 3C)

    head_outs = []
    for h in range(num_heads):                             # unrolled at trace time
        # PyTorch reshape(B,N,3,H,dh): output features laid out [3, H, dh].
        qh = qkv[:, h * dh:(h + 1) * dh]                   # (N, dh), lane-aligned
        kh = qkv[:, c + h * dh:c + (h + 1) * dh]
        vh = qkv[:, 2 * c + h * dh:2 * c + (h + 1) * dh]

        # scores = q @ k^T * scale  (contract over head_dim, no transpose copy)
        s = lax.dot_general(qh, kh, (((1,), (1,)), ((), ())),
                            preferred_element_type=jnp.float32) * scale  # (N, N)
        s = s - jnp.max(s, axis=-1, keepdims=True)
        e = jnp.exp(s)
        # Softmax denominator on the EUP (reciprocal) instead of a VALU divide.
        p = e * pl.reciprocal(jnp.sum(e, axis=-1, keepdims=True), approx=True)
        attn_ref[0, h, :, :] = p.astype(attn_ref.dtype)

        head_outs.append(jnp.dot(p, vh, preferred_element_type=jnp.float32))

    # concat over heads == the PyTorch transpose(1,2).reshape(B,N,C)
    o = jnp.concatenate(head_outs, axis=-1)                # (N, C)
    y = jnp.dot(o, wproj_ref[...],
                preferred_element_type=jnp.float32) + bproj_ref[...]
    out_ref[0, :, :] = y.astype(out_ref.dtype)


def attention_forward(x, w_qkv, b_qkv, w_proj, b_proj, *,
                      num_heads, qk_scale=None):
    """x: (B,N,C); w_qkv: (3C,C); b_qkv: (3C,); w_proj: (C,C); b_proj: (C,).

    Weights are in PyTorch nn.Linear layout (out_features, in_features)."""
    B, N, C = x.shape
    assert C % num_heads == 0
    dh = C // num_heads
    scale = float(qk_scale) if qk_scale is not None else float(dh) ** -0.5

    # Pre-transpose to (in, out) so the kernel does plain row-major matmuls.
    wqkv_t = jnp.asarray(w_qkv).T.astype(jnp.float32)       # (C, 3C)
    wproj_t = jnp.asarray(w_proj).T.astype(jnp.float32)     # (C, C)
    bqkv2 = jnp.asarray(b_qkv).reshape(1, 3 * C).astype(jnp.float32)
    bproj2 = jnp.asarray(b_proj).reshape(1, C).astype(jnp.float32)

    kernel = partial(_attention_kernel, num_heads=num_heads, scale=scale)

    out, attn = pl.pallas_call(
        kernel,
        out_shape=(jax.ShapeDtypeStruct((B, N, C), x.dtype),
                   jax.ShapeDtypeStruct((B, num_heads, N, N), x.dtype)),
        grid=(B,),
        in_specs=[
            pl.BlockSpec((1, N, C), lambda b: (b, 0, 0)),       # x: per-batch tile
            pl.BlockSpec((C, 3 * C), lambda b: (0, 0)),         # Wqkv^T: resident
            pl.BlockSpec((1, 3 * C), lambda b: (0, 0)),         # bqkv:  resident
            pl.BlockSpec((C, C), lambda b: (0, 0)),             # Wproj^T: resident
            pl.BlockSpec((1, C), lambda b: (0, 0)),             # bproj: resident
        ],
        out_specs=(
            pl.BlockSpec((1, N, C), lambda b: (b, 0, 0)),
            pl.BlockSpec((1, num_heads, N, N), lambda b: (b, 0, 0, 0)),
        ),
        compiler_params=pltpu.CompilerParams(
            dimension_semantics=("parallel",)),                 # megacore on v7x
    )(x, wqkv_t, bqkv2, wproj_t, bproj2)
    return out, attn


def _reference(x, w_qkv, b_qkv, w_proj, b_proj, *, num_heads, qk_scale=None):
    """Pure-JAX reference mirroring the PyTorch Attention.forward (eval)."""
    B, N, C = x.shape
    dh = C // num_heads
    scale = float(qk_scale) if qk_scale is not None else float(dh) ** -0.5
    hp = jax.lax.Precision.HIGHEST
    qkv = jnp.einsum("bnc,dc->bnd", x, w_qkv, precision=hp) + b_qkv
    qkv = qkv.reshape(B, N, 3, num_heads, dh).transpose(2, 0, 3, 1, 4)
    q, k, v = qkv[0], qkv[1], qkv[2]
    attn = jnp.einsum("bhnd,bhmd->bhnm", q, k, precision=hp) * scale
    attn = jax.nn.softmax(attn, axis=-1)
    out = jnp.einsum("bhnm,bhmd->bhnd", attn, v, precision=hp)
    out = out.transpose(0, 2, 1, 3).reshape(B, N, C)
    out = jnp.einsum("bnc,dc->bnd", out, w_proj, precision=hp) + b_proj
    return out, attn


if __name__ == "__main__":
    # Small shapes consistent with the module: B=2, seq N=16, dim C=256,
    # num_heads=2  -> head_dim = 128 (lane-aligned), N multiple of 8.
    B, N, C, H = 2, 16, 256, 2

    key = jax.random.PRNGKey(0)
    kx, kw1, kw2, kb2 = jax.random.split(key, 4)
    x = jax.random.normal(kx, (B, N, C), dtype=jnp.float32)
    w_qkv = jax.random.normal(kw1, (3 * C, C), dtype=jnp.float32) / math.sqrt(C)
    b_qkv = jnp.zeros((3 * C,), dtype=jnp.float32)      # qkv_bias=False (default)
    w_proj = jax.random.normal(kw2, (C, C), dtype=jnp.float32) / math.sqrt(C)
    b_proj = jax.random.normal(kb2, (C,), dtype=jnp.float32) * 0.02

    out, attn = attention_forward(x, w_qkv, b_qkv, w_proj, b_proj, num_heads=H)
    jax.block_until_ready((out, attn))

    ref_out, ref_attn = _reference(x, w_qkv, b_qkv, w_proj, b_proj, num_heads=H)

    # MXU default precision for f32 operands may use bf16 passes (and the
    # softmax reciprocal is the approx EUP op), so compare against the
    # HIGHEST-precision reference with a correspondingly relaxed tolerance.
    assert np.allclose(np.asarray(attn), np.asarray(ref_attn),
                       rtol=2e-2, atol=2e-2), "attn mismatch"
    assert np.allclose(np.asarray(out), np.asarray(ref_out),
                       rtol=2e-2, atol=2e-2), "out mismatch"

    print("KERNEL_OK")
</pallas_src>

<mosaic_0001>
module attributes {stable_mosaic.version = 11 : i64} {
  func.func @_attention_kernel(%arg0: i32, %arg1: memref<1x16x256xf32, #tpu.memory_space<vmem>>, %arg2: memref<256x768xf32, #tpu.memory_space<vmem>>, %arg3: memref<1x768xf32, #tpu.memory_space<vmem>>, %arg4: memref<256x256xf32, #tpu.memory_space<vmem>>, %arg5: memref<1x256xf32, #tpu.memory_space<vmem>>, %arg6: memref<1x16x256xf32, #tpu.memory_space<vmem>>, %arg7: memref<1x2x16x16xf32, #tpu.memory_space<vmem>>) attributes {dimension_semantics = [#tpu.dimension_semantics<parallel>], iteration_bounds = array<i64: 2>, scalar_prefetch = 0 : i64, scratch_operands = 0 : i64, tpu.core_type = #tpu.core_type<tc>, window_params = [{transform_indices = @transform_0, window_bounds = array<i64: 1, 16, 256>}, {pipeline_mode = #tpu.pipeline_mode<synchronous>, transform_indices = @transform_1, window_bounds = array<i64: 256, 768>}, {pipeline_mode = #tpu.pipeline_mode<synchronous>, transform_indices = @transform_2, window_bounds = array<i64: 1, 768>}, {pipeline_mode = #tpu.pipeline_mode<synchronous>, transform_indices = @transform_3, window_bounds = array<i64: 256, 256>}, {pipeline_mode = #tpu.pipeline_mode<synchronous>, transform_indices = @transform_4, window_bounds = array<i64: 1, 256>}, {transform_indices = @transform_5, window_bounds = array<i64: 1, 16, 256>}, {transform_indices = @transform_6, window_bounds = array<i64: 1, 2, 16, 16>}]} {
    %c0 = arith.constant 0 : index
    %c0_0 = arith.constant 0 : index
    %c0_1 = arith.constant 0 : index
    %0 = vector.load %arg1[%c0, %c0_0, %c0_1] : memref<1x16x256xf32, #tpu.memory_space<vmem>>, vector<1x16x256xf32>
    %1 = vector.shape_cast %0 : vector<1x16x256xf32> to vector<16x256xf32>
    %c0_2 = arith.constant 0 : index
    %c0_3 = arith.constant 0 : index
    %2 = vector.load %arg2[%c0_2, %c0_3] : memref<256x768xf32, #tpu.memory_space<vmem>>, vector<256x768xf32>
    %cst = arith.constant dense<0.000000e+00> : vector<16x768xf32>
    %3 = tpu.matmul %1, %2, %cst {dimension_numbers = #tpu.dot_dimension_numbers<[1], [0], [0], [1], [0, 0, 1, 1], [], []>} : vector<16x256xf32>, vector<256x768xf32>, vector<16x768xf32> -> vector<16x768xf32>
    %c0_4 = arith.constant 0 : index
    %c0_5 = arith.constant 0 : index
    %4 = vector.load %arg3[%c0_4, %c0_5] : memref<1x768xf32, #tpu.memory_space<vmem>>, vector<1x768xf32>
    %5 = vector.broadcast %4 : vector<1x768xf32> to vector<16x768xf32>
    %6 = arith.addf %3, %5 : vector<16x768xf32>
    %7 = vector.extract_strided_slice %6 {offsets = [0, 0], sizes = [16, 128], strides = [1, 1]} : vector<16x768xf32> to vector<16x128xf32>
    %8 = vector.extract_strided_slice %6 {offsets = [0, 256], sizes = [16, 128], strides = [1, 1]} : vector<16x768xf32> to vector<16x128xf32>
    %9 = vector.extract_strided_slice %6 {offsets = [0, 512], sizes = [16, 128], strides = [1, 1]} : vector<16x768xf32> to vector<16x128xf32>
    %cst_6 = arith.constant dense<0.000000e+00> : vector<16x16xf32>
    %10 = tpu.matmul %7, %8, %cst_6 {dimension_numbers = #tpu.dot_dimension_numbers<[1], [1], [0], [0], [0, 0, 1, 0], [], []>} : vector<16x128xf32>, vector<16x128xf32>, vector<16x16xf32> -> vector<16x16xf32>
    %cst_7 = arith.constant 0.0883883461 : f32
    %11 = vector.broadcast %cst_7 : f32 to vector<16x16xf32>
    %12 = arith.mulf %10, %11 : vector<16x16xf32>
    %cst_8 = arith.constant dense<0xFF800000> : vector<16xf32>
    %13 = vector.multi_reduction <maximumf>, %12, %cst_8 [1] : vector<16x16xf32> to vector<16xf32>
    %14 = vector.shape_cast %13 : vector<16xf32> to vector<16x1xf32>
    %15 = vector.broadcast %14 : vector<16x1xf32> to vector<16x16xf32>
    %16 = arith.subf %12, %15 : vector<16x16xf32>
    %17 = math.exp %16 : vector<16x16xf32>
    %cst_9 = arith.constant dense<0.000000e+00> : vector<16xf32>
    %18 = vector.multi_reduction <add>, %17, %cst_9 [1] : vector<16x16xf32> to vector<16xf32>
    %19 = vector.shape_cast %18 : vector<16xf32> to vector<16x1xf32>
    %20 = tpu.reciprocal %19 {approx = true} : vector<16x1xf32> -> vector<16x1xf32>
    %21 = vector.broadcast %20 : vector<16x1xf32> to vector<16x16xf32>
    %22 = arith.mulf %17, %21 : vector<16x16xf32>
    %c0_10 = arith.constant 0 : index
    %c0_11 = arith.constant 0 : index
    %c0_12 = arith.constant 0 : index
    %c0_13 = arith.constant 0 : index
    %23 = vector.load %arg7[%c0_10, %c0_11, %c0_12, %c0_13] : memref<1x2x16x16xf32, #tpu.memory_space<vmem>>, vector<1x1x16x16xf32>
    %24 = vector.shape_cast %23 : vector<1x1x16x16xf32> to vector<16x16xf32>
    %25 = vector.shape_cast %22 : vector<16x16xf32> to vector<1x1x16x16xf32>
    tpu.vector_store %arg7[%c0_10, %c0_11, %c0_12, %c0_13], %25 {strides = array<i32>} : memref<1x2x16x16xf32, #tpu.memory_space<vmem>>, vector<1x1x16x16xf32>,
    %cst_14 = arith.constant dense<0.000000e+00> : vector<16x128xf32>
    %26 = tpu.matmul %22, %9, %cst_14 {dimension_numbers = #tpu.dot_dimension_numbers<[1], [0], [0], [1], [0, 0, 1, 1], [], []>} : vector<16x16xf32>, vector<16x128xf32>, vector<16x128xf32> -> vector<16x128xf32>
    %27 = vector.extract_strided_slice %6 {offsets = [0, 128], sizes = [16, 128], strides = [1, 1]} : vector<16x768xf32> to vector<16x128xf32>
    %28 = vector.extract_strided_slice %6 {offsets = [0, 384], sizes = [16, 128], strides = [1, 1]} : vector<16x768xf32> to vector<16x128xf32>
    %29 = vector.extract_strided_slice %6 {offsets = [0, 640], sizes = [16, 128], strides = [1, 1]} : vector<16x768xf32> to vector<16x128xf32>
    %cst_15 = arith.constant dense<0.000000e+00> : vector<16x16xf32>
    %30 = tpu.matmul %27, %28, %cst_15 {dimension_numbers = #tpu.dot_dimension_numbers<[1], [1], [0], [0], [0, 0, 1, 0], [], []>} : vector<16x128xf32>, vector<16x128xf32>, vector<16x16xf32> -> vector<16x16xf32>
    %cst_16 = arith.constant 0.0883883461 : f32
    %31 = vector.broadcast %cst_16 : f32 to vector<16x16xf32>
    %32 = arith.mulf %30, %31 : vector<16x16xf32>
    %cst_17 = arith.constant dense<0xFF800000> : vector<16xf32>
    %33 = vector.multi_reduction <maximumf>, %32, %cst_17 [1] : vector<16x16xf32> to vector<16xf32>
    %34 = vector.shape_cast %33 : vector<16xf32> to vector<16x1xf32>
    %35 = vector.broadcast %34 : vector<16x1xf32> to vector<16x16xf32>
    %36 = arith.subf %32, %35 : vector<16x16xf32>
    %37 = math.exp %36 : vector<16x16xf32>
    %cst_18 = arith.constant dense<0.000000e+00> : vector<16xf32>
    %38 = vector.multi_reduction <add>, %37, %cst_18 [1] : vector<16x16xf32> to vector<16xf32>
    %39 = vector.shape_cast %38 : vector<16xf32> to vector<16x1xf32>
    %40 = tpu.reciprocal %39 {approx = true} : vector<16x1xf32> -> vector<16x1xf32>
    %41 = vector.broadcast %40 : vector<16x1xf32> to vector<16x16xf32>
    %42 = arith.mulf %37, %41 : vector<16x16xf32>
    %c0_19 = arith.constant 0 : index
    %c1 = arith.constant 1 : index
    %c0_20 = arith.constant 0 : index
    %c0_21 = arith.constant 0 : index
    %43 = vector.load %arg7[%c0_19, %c1, %c0_20, %c0_21] : memref<1x2x16x16xf32, #tpu.memory_space<vmem>>, vector<1x1x16x16xf32>
    %44 = vector.shape_cast %43 : vector<1x1x16x16xf32> to vector<16x16xf32>
    %45 = vector.shape_cast %42 : vector<16x16xf32> to vector<1x1x16x16xf32>
    tpu.vector_store %arg7[%c0_19, %c1, %c0_20, %c0_21], %45 {strides = array<i32>} : memref<1x2x16x16xf32, #tpu.memory_space<vmem>>, vector<1x1x16x16xf32>,
    %cst_22 = arith.constant dense<0.000000e+00> : vector<16x128xf32>
    %46 = tpu.matmul %42, %29, %cst_22 {dimension_numbers = #tpu.dot_dimension_numbers<[1], [0], [0], [1], [0, 0, 1, 1], [], []>} : vector<16x16xf32>, vector<16x128xf32>, vector<16x128xf32> -> vector<16x128xf32>
    %47 = tpu.concatenate %26, %46 in 1 : vector<16x128xf32>, vector<16x128xf32> -> vector<16x256xf32>
    %c0_23 = arith.constant 0 : index
    %c0_24 = arith.constant 0 : index
    %48 = vector.load %arg4[%c0_23, %c0_24] : memref<256x256xf32, #tpu.memory_space<vmem>>, vector<256x256xf32>
    %cst_25 = arith.constant dense<0.000000e+00> : vector<16x256xf32>
    %49 = tpu.matmul %47, %48, %cst_25 {dimension_numbers = #tpu.dot_dimension_numbers<[1], [0], [0], [1], [0, 0, 1, 1], [], []>} : vector<16x256xf32>, vector<256x256xf32>, vector<16x256xf32> -> vector<16x256xf32>
    %c0_26 = arith.constant 0 : index
    %c0_27 = arith.constant 0 : index
    %50 = vector.load %arg5[%c0_26, %c0_27] : memref<1x256xf32, #tpu.memory_space<vmem>>, vector<1x256xf32>
    %51 = vector.broadcast %50 : vector<1x256xf32> to vector<16x256xf32>
    %52 = arith.addf %49, %51 : vector<16x256xf32>
    %c0_28 = arith.constant 0 : index
    %c0_29 = arith.constant 0 : index
    %c0_30 = arith.constant 0 : index
    %53 = vector.load %arg6[%c0_28, %c0_29, %c0_30] : memref<1x16x256xf32, #tpu.memory_space<vmem>>, vector<1x16x256xf32>
    %54 = vector.shape_cast %53 : vector<1x16x256xf32> to vector<16x256xf32>
    %55 = vector.shape_cast %52 : vector<16x256xf32> to vector<1x16x256xf32>
    tpu.vector_store %arg6[%c0_28, %c0_29, %c0_30], %55 {strides = array<i32>} : memref<1x16x256xf32, #tpu.memory_space<vmem>>, vector<1x16x256xf32>,
    return
  }
  func.func @transform_0(%arg0: i32) -> (i32, i32, i32) {
    %c0_i32 = arith.constant 0 : i32
    %c0_i32_0 = arith.constant 0 : i32
    %c0_i32_1 = arith.constant 0 : i32
    return %arg0, %c0_i32, %c0_i32_0 : i32, i32, i32
  }
  func.func @transform_1(%arg0: i32) -> (i32, i32) {
    %c0_i32 = arith.constant 0 : i32
    %c0_i32_0 = arith.constant 0 : i32
    %c0_i32_1 = arith.constant 0 : i32
    return %c0_i32, %c0_i32_0 : i32, i32
  }
  func.func @transform_2(%arg0: i32) -> (i32, i32) {
    %c0_i32 = arith.constant 0 : i32
    %c0_i32_0 = arith.constant 0 : i32
    %c0_i32_1 = arith.constant 0 : i32
    return %c0_i32, %c0_i32_0 : i32, i32
  }
  func.func @transform_3(%arg0: i32) -> (i32, i32) {
    %c0_i32 = arith.constant 0 : i32
    %c0_i32_0 = arith.constant 0 : i32
    %c0_i32_1 = arith.constant 0 : i32
    return %c0_i32, %c0_i32_0 : i32, i32
  }
  func.func @transform_4(%arg0: i32) -> (i32, i32) {
    %c0_i32 = arith.constant 0 : i32
    %c0_i32_0 = arith.constant 0 : i32
    %c0_i32_1 = arith.constant 0 : i32
    return %c0_i32, %c0_i32_0 : i32, i32
  }
  func.func @transform_5(%arg0: i32) -> (i32, i32, i32) {
    %c0_i32 = arith.constant 0 : i32
    %c0_i32_0 = arith.constant 0 : i32
    %c0_i32_1 = arith.constant 0 : i32
    return %arg0, %c0_i32, %c0_i32_0 : i32, i32, i32
  }
  func.func @transform_6(%arg0: i32) -> (i32, i32, i32, i32) {
    %c0_i32 = arith.constant 0 : i32
    %c0_i32_0 = arith.constant 0 : i32
    %c0_i32_1 = arith.constant 0 : i32
    %c0_i32_2 = arith.constant 0 : i32
    return %arg0, %c0_i32, %c0_i32_0, %c0_i32_1 : i32, i32, i32, i32
  }
}

</mosaic_0001>

<llo_original>
// kernel: tpu_custom_call.1
$region0: #{tpu_custom_call.1}
  #allocation0 [shape = 'u32[]', space=smem, size = 0x4, offset = 0x4, fixed_abs, tag = 'smem constant byte address 0x4 - core index']
  #allocation1 [shape = 'u32[144,128]{1,0:T(1,128)}', space=vmem, size = 0x12000, scoped, tag = 'internal scratch']
  %s0 = inlined_call_operand.hbm [shape: f32[2,16,256], index: 0, kind: input, shape index: {}]
  %s1 = inlined_call_operand.hbm [shape: f32[256,768], index: 1, kind: input, shape index: {}]
  %s2 = inlined_call_operand.vmem [shape: f32[1,768], index: 2, kind: input, shape index: {}]
  %s3 = inlined_call_operand.hbm [shape: f32[256,256], index: 3, kind: input, shape index: {}]
  %s4 = inlined_call_operand.vmem [shape: f32[1,256], index: 4, kind: input, shape index: {}]
  %s5 = inlined_call_operand.hbm [shape: f32[2,16,256], index: 5, kind: output, shape index: {0}]
  %s6 = inlined_call_operand.hbm [shape: f32[2,2,16,16], index: 6, kind: output, shape index: {1}]
  %7 = xla_tuple %s5, %s6
  %s8 = sld [smem:[#allocation0]]
  $region73: #{tpu_custom_call.1} parent=0
    _
  %s10 = ssub.s32 1, %s8
  %s11 = scalar_select 0, %s10, %s8
  $region1: #{tpu_custom_call.1} parent=0
    #allocation2 [shape = 'u8[32768]{0}', space=vmem, size = 0x8000, scoped, tag = 'input window, operand 0']
    #allocation3 [shape = 's32[2]{0}', space=sflag, size = 0x8, scoped, tag = 'scoped memory for tpu_custom_call.1']
    #allocation4 [shape = 's32[2]{0}', space=sflag, size = 0x8, scoped, tag = 'scoped memory for tpu_custom_call.1']
    #allocation5 [shape = 'u8[786432]{0}', space=vmem, size = 0xc0000, scoped, tag = 'input window, operand 1, single buffered']
    #allocation6 [shape = 's32[1]{0}', space=sflag, size = 0x4, scoped, tag = 'scoped memory for tpu_custom_call.1']
    #allocation7 [shape = 'u8[262144]{0}', space=vmem, size = 0x40000, scoped, tag = 'input window, operand 3, single buffered']
    #allocation8 [shape = 'u8[32768]{0}', space=vmem, size = 0x8000, scoped, tag = 'output window, operand 0']
    #allocation9 [shape = 'u8[32768]{0}', space=vmem, size = 0x8000, scoped, tag = 'output window, operand 1']
    #allocation10 [shape = 's32[2]{0}', space=sflag, size = 0x8, scoped, tag = 'scoped memory for tpu_custom_call.1']
    %12 = vsyncpa [#allocation3], 0
    %s13 = scalar_lea.sflag [#allocation3], 1
    %14 = vsyncpa %s13, 0
    %15 = vsyncpa [#allocation6], 0
    %16 = vsyncpa [#allocation4], 0
    %s17 = scalar_lea.sflag [#allocation4], 1
    %18 = vsyncpa %s17, 0
    %19 = vsyncpa [#allocation10], 0
    %s20 = scalar_lea.sflag [#allocation10], 1
    %21 = vsyncpa %s20, 0
    loop: start=0, step=1, limit=4
    $region2: #{tpu_custom_call.1} parent=1 // loop_pre_header
      _
    $region3: #{tpu_custom_call.1} parent=1 // loop_header
      %s23 = sphi 0, %s27
      %p24 = scmp.ge.s32.totalorder %s23, 4
      %s33 = sphi 0, %s35
      %s36 = sphi 0, %s33
      %s37 = sphi 0, %s36
      %s53 = sphi 0, %s37
      %s57 = sphi 0, %s57
      %s59 = sphi 0, %s57
      %s60 = sphi 0, %s59
      %s74 = sphi 0, %s60
      %s78 = sphi 0, %s78
      %s80 = sphi 0, %s78
      %s81 = sphi 0, %s80
      %s95 = sphi 0, %s81
      %s99 = sphi 0, %s99
      %s101 = sphi 0, %s99
      %s102 = sphi 0, %s101
      %s116 = sphi 0, %s102
      %s120 = sphi 0, %s120
      %s122 = sphi 0, %s120
      %s123 = sphi 0, %s122
      %s137 = sphi 0, %s123
      %s143 = sphi 0, %s145
      %s146 = sphi 0, %s143
      %s147 = sphi 0, %s146
      %s163 = sphi 0, %s147
      %s169 = sphi 0, %s171
      %s172 = sphi 0, %s169
      %s173 = sphi 0, %s172
      %s189 = sphi 0, %s173
    $region4: #{tpu_custom_call.1} parent=1 // loop_header_branch
      %26 = sbr.rel (%p24) target = $region8
    $region5: #{tpu_custom_call.1} parent=1 // loop_body
      %s28 = ssub.s32 %s23, 1
      %s29 = ssub.s32 %s23, 2
      %s30 = sadd.s32 %s23, 1
      %s31 = ssub.s32 %s23, %s30
      %p32 = scmp.eq.s32.totalorder %s31, 0
      %s34 = sadd.s32 %s33, 1
      %s35 = scalar_select %p32, %s33, %s34
      %p38 = pneg %p32
      %p39 = scmp.eq.s32.totalorder %s23, 1
      %p40 = por %p38, %p39
      %p41 = scmp.ne.s32.totalorder %s33, %s36
      %p42 = scmp.eq.s32.totalorder %s23, 0
      %p43 = por %p41, %p42
      %p44 = scmp.ne.s32.totalorder %s33, %s36
      %p45 = scmp.eq.s32.totalorder %s28, 1
      %p46 = por %p44, %p45
      %p47 = scmp.ne.s32.totalorder %s36, %s37
      %p48 = scmp.eq.s32.totalorder %s28, 0
      %p49 = por %p47, %p48
      %p50 = scmp.ne.s32.totalorder %s36, %s37
      %p51 = scmp.eq.s32.totalorder %s29, 1
      %p52 = por %p50, %p51
      %p54 = scmp.ne.s32.totalorder %s37, %s53
      %p55 = scmp.eq.s32.totalorder %s29, 0
      %p56 = por %p54, %p55
      %s58 = sadd.s32 %s57, 1
      %p61 = scmp.eq.s32.totalorder %s23, 1
      %p62 = scmp.ne.s32.totalorder %s57, %s59
      %p63 = scmp.eq.s32.totalorder %s23, 0
      %p64 = por %p62, %p63
      %p65 = scmp.ne.s32.totalorder %s57, %s59
      %p66 = scmp.eq.s32.totalorder %s28, 1
      %p67 = por %p65, %p66
      %p68 = scmp.ne.s32.totalorder %s59, %s60
      %p69 = scmp.eq.s32.totalorder %s28, 0
      %p70 = por %p68, %p69
      %p71 = scmp.ne.s32.totalorder %s59, %s60
      %p72 = scmp.eq.s32.totalorder %s29, 1
      %p73 = por %p71, %p72
      %p75 = scmp.ne.s32.totalorder %s60, %s74
      %p76 = scmp.eq.s32.totalorder %s29, 0
      %p77 = por %p75, %p76
      %s79 = sadd.s32 %s78, 1
      %p82 = scmp.eq.s32.totalorder %s23, 1
      %p83 = scmp.ne.s32.totalorder %s78, %s80
      %p84 = scmp.eq.s32.totalorder %s23, 0
      %p85 = por %p83, %p84
      %p86 = scmp.ne.s32.totalorder %s78, %s80
      %p87 = scmp.eq.s32.totalorder %s28, 1
      %p88 = por %p86, %p87
      %p89 = scmp.ne.s32.totalorder %s80, %s81
      %p90 = scmp.eq.s32.totalorder %s28, 0
      %p91 = por %p89, %p90
      %p92 = scmp.ne.s32.totalorder %s80, %s81
      %p93 = scmp.eq.s32.totalorder %s29, 1
      %p94 = por %p92, %p93
      %p96 = scmp.ne.s32.totalorder %s81, %s95
      %p97 = scmp.eq.s32.totalorder %s29, 0
      %p98 = por %p96, %p97
      %s100 = sadd.s32 %s99, 1
      %p103 = scmp.eq.s32.totalorder %s23, 1
      %p104 = scmp.ne.s32.totalorder %s99, %s101
      %p105 = scmp.eq.s32.totalorder %s23, 0
      %p106 = por %p104, %p105
      %p107 = scmp.ne.s32.totalorder %s99, %s101
      %p108 = scmp.eq.s32.totalorder %s28, 1
      %p109 = por %p107, %p108
      %p110 = scmp.ne.s32.totalorder %s101, %s102
      %p111 = scmp.eq.s32.totalorder %s28, 0
      %p112 = por %p110, %p111
      %p113 = scmp.ne.s32.totalorder %s101, %s102
      %p114 = scmp.eq.s32.totalorder %s29, 1
      %p115 = por %p113, %p114
      %p117 = scmp.ne.s32.totalorder %s102, %s116
      %p118 = scmp.eq.s32.totalorder %s29, 0
      %p119 = por %p117, %p118
      %s121 = sadd.s32 %s120, 1
      %p124 = scmp.eq.s32.totalorder %s23, 1
      %p125 = scmp.ne.s32.totalorder %s120, %s122
      %p126 = scmp.eq.s32.totalorder %s23, 0
      %p127 = por %p125, %p126
      %p128 = scmp.ne.s32.totalorder %s120, %s122
      %p129 = scmp.eq.s32.totalorder %s28, 1
      %p130 = por %p128, %p129
      %p131 = scmp.ne.s32.totalorder %s122, %s123
      %p132 = scmp.eq.s32.totalorder %s28, 0
      %p133 = por %p131, %p132
      %p134 = scmp.ne.s32.totalorder %s122, %s123
      %p135 = scmp.eq.s32.totalorder %s29, 1
      %p136 = por %p134, %p135
      %p138 = scmp.ne.s32.totalorder %s123, %s137
      %p139 = scmp.eq.s32.totalorder %s29, 0
      %p140 = por %p138, %p139
      %s141 = ssub.s32 %s23, %s30
      %p142 = scmp.eq.s32.totalorder %s141, 0
      %s144 = sadd.s32 %s143, 1
      %s145 = scalar_select %p142, %s143, %s144
      %p148 = pneg %p142
      %p149 = scmp.eq.s32.totalorder %s23, 1
      %p150 = por %p148, %p149
      %p151 = scmp.ne.s32.totalorder %s143, %s146
      %p152 = scmp.eq.s32.totalorder %s23, 0
      %p153 = por %p151, %p152
      %p154 = scmp.ne.s32.totalorder %s143, %s146
      %p155 = scmp.eq.s32.totalorder %s28, 1
      %p156 = por %p154, %p155
      %p157 = scmp.ne.s32.totalorder %s146, %s147
      %p158 = scmp.eq.s32.totalorder %s28, 0
      %p159 = por %p157, %p158
      %p160 = scmp.ne.s32.totalorder %s146, %s147
      %p161 = scmp.eq.s32.totalorder %s29, 1
      %p162 = por %p160, %p161
      %p164 = scmp.ne.s32.totalorder %s147, %s163
      %p165 = scmp.eq.s32.totalorder %s29, 0
      %p166 = por %p164, %p165
      %s167 = ssub.s32 %s23, %s30
      %p168 = scmp.eq.s32.totalorder %s167, 0
      %s170 = sadd.s32 %s169, 1
      %s171 = scalar_select %p168, %s169, %s170
      %p174 = pneg %p168
      %p175 = scmp.eq.s32.totalorder %s23, 1
      %p176 = por %p174, %p175
      %p177 = scmp.ne.s32.totalorder %s169, %s172
      %p178 = scmp.eq.s32.totalorder %s23, 0
      %p179 = por %p177, %p178
      %p180 = scmp.ne.s32.totalorder %s169, %s172
      %p181 = scmp.eq.s32.totalorder %s28, 1
      %p182 = por %p180, %p181
      %p183 = scmp.ne.s32.totalorder %s172, %s173
      %p184 = scmp.eq.s32.totalorder %s28, 0
      %p185 = por %p183, %p184
      %p186 = scmp.ne.s32.totalorder %s172, %s173
      %p187 = scmp.eq.s32.totalorder %s29, 1
      %p188 = por %p186, %p187
      %p190 = scmp.ne.s32.totalorder %s173, %s189
      %p191 = scmp.eq.s32.totalorder %s29, 0
      %p192 = por %p190, %p191
      %p193 = scmp.le.s32.totalorder 1, %s23
      %p194 = scmp.lt.s32.totalorder %s23, 3
      %p195 = pnand %p193, %p194
      %p196 = pneg %p195
      // Predicated region
      $region9: #{tpu_custom_call.1} parent=5 // pred_check
        _
      $region10: #{tpu_custom_call.1} parent=5 // pred_check_branch
        %198 = sbr.rel (%p195) target = $region12
      $region11: #{tpu_custom_call.1} parent=5 // pred_region
        %s199 = ssub.s32 %s23, 1
        // Predicated region
        $region13: #{tpu_custom_call.1} parent=11 // pred_check
          %p200 = pneg %p70
        $region14: #{tpu_custom_call.1} parent=11 // pred_check_branch
          %202 = sbr.rel (%p200) target = $region16
        $region15: #{tpu_custom_call.1} parent=11 // pred_region
          %s204 = ssub.s32 24576, 24576
          %205 = vsyncadd [#allocation6], %s204
          %s206 = sshll.u32 [#allocation5], 4
          %s207 = int_to_ptr.vmem [resolvable:$true] %s206
          %212 = dma.hbm_to_vmem [thread:$0]  %s1, 24576, %s207, [#allocation6], 768, 768, 48
        $region16: #{tpu_custom_call.1} parent=11 // pred_fallthru
          _
        // Predicated region
        $region17: #{tpu_custom_call.1} parent=11 // pred_check
          %p213 = pneg %p91
        $region18: #{tpu_custom_call.1} parent=11 // pred_check_branch
          %215 = sbr.rel (%p213) target = $region20
        $region19: #{tpu_custom_call.1} parent=11 // pred_region
          _
        $region20: #{tpu_custom_call.1} parent=11 // pred_fallthru
          _
        // Predicated region
        $region21: #{tpu_custom_call.1} parent=11 // pred_check
          %p216 = pneg %p112
        $region22: #{tpu_custom_call.1} parent=11 // pred_check_branch
          %218 = sbr.rel (%p216) target = $region24
        $region23: #{tpu_custom_call.1} parent=11 // pred_region
          %s220 = ssub.s32 8192, 8192
          %221 = vsyncadd [#allocation6], %s220
          %s222 = sshll.u32 [#allocation7], 4
          %s223 = int_to_ptr.vmem [resolvable:$true] %s222
          %228 = dma.hbm_to_vmem [thread:$0]  %s3, 8192, %s223, [#allocation6], 256, 256, 16
        $region24: #{tpu_custom_call.1} parent=11 // pred_fallthru
          _
        // Predicated region
        $region25: #{tpu_custom_call.1} parent=11 // pred_check
          %p229 = pneg %p133
        $region26: #{tpu_custom_call.1} parent=11 // pred_check_branch
          %231 = sbr.rel (%p229) target = $region28
        $region27: #{tpu_custom_call.1} parent=11 // pred_region
          _
        $region28: #{tpu_custom_call.1} parent=11 // pred_fallthru
          _
      $region12: #{tpu_custom_call.1} parent=5 // pred_fallthru
        _
      %p232 = scmp.lt.s32.totalorder %s23, 2
      // Predicated region
      $region29: #{tpu_custom_call.1} parent=5 // pred_check
        %p233 = pneg %p232
      $region30: #{tpu_custom_call.1} parent=5 // pred_check_branch
        %235 = sbr.rel (%p233) target = $region32
      $region31: #{tpu_custom_call.1} parent=5 // pred_region
        // Predicated region
        $region33: #{tpu_custom_call.1} parent=31 // pred_check
          %p236 = pneg %p43
        $region34: #{tpu_custom_call.1} parent=31 // pred_check_branch
          %238 = sbr.rel (%p236) target = $region36
        $region35: #{tpu_custom_call.1} parent=31 // pred_region
          %s239 = sand.u32 %s33, 1
          %s240 = scalar_lea.sflag [#allocation3], %s239
          %s241 = sand.u32 %s33, 1
          %s242 = smul.addr %s241, 32
          %s243 = scalar_lea.vmem [#allocation2], %s242
          %s245 = ssub.s32 512, 512
          %246 = vsyncadd %s240, %s245
          %s247 = smul.addr %s23, 4
          %s248 = smul.addr %s247, 128
          %s249 = scalar_lea.hbm %s0, %s248
          %s250 = sshll.u32 %s243, 4
          %s251 = int_to_ptr.vmem [resolvable:$true] %s250
          %256 = dma.hbm_to_vmem [thread:$0]  %s249, 512, %s251, %s240, 256, 256, 16
        $region36: #{tpu_custom_call.1} parent=31 // pred_fallthru
          _
      $region32: #{tpu_custom_call.1} parent=5 // pred_fallthru
        _
      %p257 = scmp.le.s32.totalorder 1, %s23
      %p258 = scmp.lt.s32.totalorder %s23, 3
      %p259 = pnand %p257, %p258
      %p260 = pneg %p259
      // Predicated region
      $region37: #{tpu_custom_call.1} parent=5 // pred_check
        _
      $region38: #{tpu_custom_call.1} parent=5 // pred_check_branch
        %262 = sbr.rel (%p259) target = $region40
      $region39: #{tpu_custom_call.1} parent=5 // pred_region
        %s263 = ssub.s32 %s23, 1
        %s264 = sand.u32 %s36, 1
        %s265 = scalar_lea.sflag [#allocation3], %s264
        %s266 = sand.u32 %s36, 1
        %s267 = smul.addr %s266, 32
        %s268 = scalar_lea.vmem [#allocation2], %s267
        // Predicated region
        $region41: #{tpu_custom_call.1} parent=39 // pred_check
          %p269 = pneg %p49
        $region42: #{tpu_custom_call.1} parent=39 // pred_check_branch
          %271 = sbr.rel (%p269) target = $region44
        $region43: #{tpu_custom_call.1} parent=39 // pred_region
          %272 = dma.done %s265, 512
        $region44: #{tpu_custom_call.1} parent=39 // pred_fallthru
          _
        // Predicated region
        $region45: #{tpu_custom_call.1} parent=39 // pred_check
          %p273 = pneg %p70
        $region46: #{tpu_custom_call.1} parent=39 // pred_check_branch
          %275 = sbr.rel (%p273) target = $region48
        $region47: #{tpu_custom_call.1} parent=39 // pred_region
          %276 = dma.done [#allocation6], 24576
        $region48: #{tpu_custom_call.1} parent=39 // pred_fallthru
          _
        // Predicated region
        $region49: #{tpu_custom_call.1} parent=39 // pred_check
          %p277 = pneg %p112
        $region50: #{tpu_custom_call.1} parent=39 // pred_check_branch
          %279 = sbr.rel (%p277) target = $region52
        $region51: #{tpu_custom_call.1} parent=39 // pred_region
          %280 = dma.done [#allocation6], 8192
        $region52: #{tpu_custom_call.1} parent=39 // pred_fallthru
          _
        %s281 = sand.u32 %s36, 1
        %s282 = scalar_lea.sflag [#allocation3], %s281
        %s283 = sand.u32 %s36, 1
        %s284 = smul.addr %s283, 32
        %s285 = scalar_lea.vmem [#allocation2], %s284
        %p286 = pneg %p49
        %p287 = pneg %p46
        %p288 = pneg %p70
        %p289 = pneg %p67
        %p290 = pneg %p91
        %p291 = pneg %p88
        %p292 = pneg %p112
        %p293 = pneg %p109
        %p294 = pneg %p133
        %p295 = pneg %p130
        %p296 = pneg %p159
        %p297 = pneg %p156
        %s298 = sand.u32 %s146, 1
        %s299 = scalar_lea.sflag [#allocation4], %s298
        %s300 = sand.u32 %s146, 1
        %s301 = smul.addr %s300, 32
        %s302 = scalar_lea.vmem [#allocation8], %s301
        %p303 = pneg %p185
        %p304 = pneg %p182
        %s305 = sand.u32 %s172, 1
        %s306 = scalar_lea.sflag [#allocation10], %s305
        %s307 = sand.u32 %s172, 1
        %s308 = smul.addr %s307, 32
        %s309 = scalar_lea.vmem [#allocation9], %s308
        %v310 = vld [vmem:[%s268] sm:$0xff]
        %v311 = vld [vmem:[%s268 + $0x8] sm:$0xff]
        %v312 = vld [vmem:[%s268 + $0x10] sm:$0xff]
        %v313 = vld [vmem:[%s268 + $0x18] sm:$0xff]
        %v314 = vld [vmem:[#allocation5] sm:$0xff]
        %v315 = vld [vmem:[#allocation5 + $0x8] sm:$0xff]
        %v316 = vld [vmem:[#allocation5 + $0x10] sm:$0xff]
        %v317 = vld [vmem:[#allocation5 + $0x18] sm:$0xff]
        %v318 = vld [vmem:[#allocation5 + $0x20] sm:$0xff]
        %v319 = vld [vmem:[#allocation5 + $0x28] sm:$0xff]
        %v320 = vld [vmem:[#allocation5 + $0x30] sm:$0xff]
        %v321 = vld [vmem:[#allocation5 + $0x38] sm:$0xff]
        %v322 = vld [vmem:[#allocation5 + $0x40] sm:$0xff]
        %v323 = vld [vmem:[#allocation5 + $0x48] sm:$0xff]
        %v324 = vld [vmem:[#allocation5 + $0x50] sm:$0xff]
        %v325 = vld [vmem:[#allocation5 + $0x58] sm:$0xff]
        %v326 = vld [vmem:[#allocation5 + $0x60] sm:$0xff]
        %v327 = vld [vmem:[#allocation5 + $0x68] sm:$0xff]
        %v328 = vld [vmem:[#allocation5 + $0x70] sm:$0xff]
        %v329 = vld [vmem:[#allocation5 + $0x78] sm:$0xff]
        %v330 = vld [vmem:[#allocation5 + $0x80] sm:$0xff]
        %v331 = vld [vmem:[#allocation5 + $0x88] sm:$0xff]
        %v332 = vld [vmem:[#allocation5 + $0x90] sm:$0xff]
        %v333 = vld [vmem:[#allocation5 + $0x98] sm:$0xff]
        %v334 = vld [vmem:[#allocation5 + $0xa0] sm:$0xff]
        %v335 = vld [vmem:[#allocation5 + $0xa8] sm:$0xff]
        %v336 = vld [vmem:[#allocation5 + $0xb0] sm:$0xff]
        %v337 = vld [vmem:[#allocation5 + $0xb8] sm:$0xff]
        %v338 = vld [vmem:[#allocation5 + $0xc0] sm:$0xff]
        %v339 = vld [vmem:[#allocation5 + $0xc8] sm:$0xff]
        %v340 = vld [vmem:[#allocation5 + $0xd0] sm:$0xff]
        %v341 = vld [vmem:[#allocation5 + $0xd8] sm:$0xff]
        %v342 = vld [vmem:[#allocation5 + $0xe0] sm:$0xff]
        %v343 = vld [vmem:[#allocation5 + $0xe8] sm:$0xff]
        %v344 = vld [vmem:[#allocation5 + $0xf0] sm:$0xff]
        %v345 = vld [vmem:[#allocation5 + $0xf8] sm:$0xff]
        %v346 = vld [vmem:[#allocation5 + $0x100] sm:$0xff]
        %v347 = vld [vmem:[#allocation5 + $0x108] sm:$0xff]
        %v348 = vld [vmem:[#allocation5 + $0x110] sm:$0xff]
        %v349 = vld [vmem:[#allocation5 + $0x118] sm:$0xff]
        %v350 = vld [vmem:[#allocation5 + $0x120] sm:$0xff]
        %v351 = vld [vmem:[#allocation5 + $0x128] sm:$0xff]
        %v352 = vld [vmem:[#allocation5 + $0x130] sm:$0xff]
        %v353 = vld [vmem:[#allocation5 + $0x138] sm:$0xff]
        %v354 = vld [vmem:[#allocation5 + $0x140] sm:$0xff]
        %v355 = vld [vmem:[#allocation5 + $0x148] sm:$0xff]
        %v356 = vld [vmem:[#allocation5 + $0x150] sm:$0xff]
        %v357 = vld [vmem:[#allocation5 + $0x158] sm:$0xff]
        %v358 = vld [vmem:[#allocation5 + $0x160] sm:$0xff]
        %v359 = vld [vmem:[#allocation5 + $0x168] sm:$0xff]
        %v360 = vld [vmem:[#allocation5 + $0x170] sm:$0xff]
        %v361 = vld [vmem:[#allocation5 + $0x178] sm:$0xff]
        %v362 = vld [vmem:[#allocation5 + $0x180] sm:$0xff]
        %v363 = vld [vmem:[#allocation5 + $0x188] sm:$0xff]
        %v364 = vld [vmem:[#allocation5 + $0x190] sm:$0xff]
        %v365 = vld [vmem:[#allocation5 + $0x198] sm:$0xff]
        %v366 = vld [vmem:[#allocation5 + $0x1a0] sm:$0xff]
        %v367 = vld [vmem:[#allocation5 + $0x1a8] sm:$0xff]
        %v368 = vld [vmem:[#allocation5 + $0x1b0] sm:$0xff]
        %v369 = vld [vmem:[#allocation5 + $0x1b8] sm:$0xff]
        %v370 = vld [vmem:[#allocation5 + $0x1c0] sm:$0xff]
        %v371 = vld [vmem:[#allocation5 + $0x1c8] sm:$0xff]
        %v372 = vld [vmem:[#allocation5 + $0x1d0] sm:$0xff]
        %v373 = vld [vmem:[#allocation5 + $0x1d8] sm:$0xff]
        %v374 = vld [vmem:[#allocation5 + $0x1e0] sm:$0xff]
        %v375 = vld [vmem:[#allocation5 + $0x1e8] sm:$0xff]
        %v376 = vld [vmem:[#allocation5 + $0x1f0] sm:$0xff]
        %v377 = vld [vmem:[#allocation5 + $0x1f8] sm:$0xff]
        %v378 = vld [vmem:[#allocation5 + $0x200] sm:$0xff]
        %v379 = vld [vmem:[#allocation5 + $0x208] sm:$0xff]
        %v380 = vld [vmem:[#allocation5 + $0x210] sm:$0xff]
        %v381 = vld [vmem:[#allocation5 + $0x218] sm:$0xff]
        %v382 = vld [vmem:[#allocation5 + $0x220] sm:$0xff]
        %v383 = vld [vmem:[#allocation5 + $0x228] sm:$0xff]
        %v384 = vld [vmem:[#allocation5 + $0x230] sm:$0xff]
        %v385 = vld [vmem:[#allocation5 + $0x238] sm:$0xff]
        %v386 = vld [vmem:[#allocation5 + $0x240] sm:$0xff]
        %v387 = vld [vmem:[#allocation5 + $0x248] sm:$0xff]
        %v388 = vld [vmem:[#allocation5 + $0x250] sm:$0xff]
        %v389 = vld [vmem:[#allocation5 + $0x258] sm:$0xff]
        %v390 = vld [vmem:[#allocation5 + $0x260] sm:$0xff]
        %v391 = vld [vmem:[#allocation5 + $0x268] sm:$0xff]
        %v392 = vld [vmem:[#allocation5 + $0x270] sm:$0xff]
        %v393 = vld [vmem:[#allocation5 + $0x278] sm:$0xff]
        %v394 = vld [vmem:[#allocation5 + $0x280] sm:$0xff]
        %v395 = vld [vmem:[#allocation5 + $0x288] sm:$0xff]
        %v396 = vld [vmem:[#allocation5 + $0x290] sm:$0xff]
        %v397 = vld [vmem:[#allocation5 + $0x298] sm:$0xff]
        %v398 = vld [vmem:[#allocation5 + $0x2a0] sm:$0xff]
        %v399 = vld [vmem:[#allocation5 + $0x2a8] sm:$0xff]
        %v400 = vld [vmem:[#allocation5 + $0x2b0] sm:$0xff]
        %v401 = vld [vmem:[#allocation5 + $0x2b8] sm:$0xff]
        %v402 = vld [vmem:[#allocation5 + $0x2c0] sm:$0xff]
        %v403 = vld [vmem:[#allocation5 + $0x2c8] sm:$0xff]
        %v404 = vld [vmem:[#allocation5 + $0x2d0] sm:$0xff]
        %v405 = vld [vmem:[#allocation5 + $0x2d8] sm:$0xff]
        %v406 = vld [vmem:[#allocation5 + $0x2e0] sm:$0xff]
        %v407 = vld [vmem:[#allocation5 + $0x2e8] sm:$0xff]
        %v408 = vld [vmem:[#allocation5 + $0x2f0] sm:$0xff]
        %v409 = vld [vmem:[#allocation5 + $0x2f8] sm:$0xff]
        %v410 = vld [vmem:[#allocation5 + $0x300] sm:$0xff]
        %v411 = vld [vmem:[#allocation5 + $0x308] sm:$0xff]
        %v412 = vld [vmem:[#allocation5 + $0x310] sm:$0xff]
        %v413 = vld [vmem:[#allocation5 + $0x318] sm:$0xff]
        %v414 = vld [vmem:[#allocation5 + $0x320] sm:$0xff]
        %v415 = vld [vmem:[#allocation5 + $0x328] sm:$0xff]
        %v416 = vld [vmem:[#allocation5 + $0x330] sm:$0xff]
        %v417 = vld [vmem:[#allocation5 + $0x338] sm:$0xff]
        %v418 = vld [vmem:[#allocation5 + $0x340] sm:$0xff]
        %v419 = vld [vmem:[#allocation5 + $0x348] sm:$0xff]
        %v420 = vld [vmem:[#allocation5 + $0x350] sm:$0xff]
        %v421 = vld [vmem:[#allocation5 + $0x358] sm:$0xff]
        %v422 = vld [vmem:[#allocation5 + $0x360] sm:$0xff]
        %v423 = vld [vmem:[#allocation5 + $0x368] sm:$0xff]
        %v424 = vld [vmem:[#allocation5 + $0x370] sm:$0xff]
        %v425 = vld [vmem:[#allocation5 + $0x378] sm:$0xff]
        %v426 = vld [vmem:[#allocation5 + $0x380] sm:$0xff]
        %v427 = vld [vmem:[#allocation5 + $0x388] sm:$0xff]
        %v428 = vld [vmem:[#allocation5 + $0x390] sm:$0xff]
        %v429 = vld [vmem:[#allocation5 + $0x398] sm:$0xff]
        %v430 = vld [vmem:[#allocation5 + $0x3a0] sm:$0xff]
        %v431 = vld [vmem:[#allocation5 + $0x3a8] sm:$0xff]
        %v432 = vld [vmem:[#allocation5 + $0x3b0] sm:$0xff]
        %v433 = vld [vmem:[#allocation5 + $0x3b8] sm:$0xff]
        %v434 = vld [vmem:[#allocation5 + $0x3c0] sm:$0xff]
        %v435 = vld [vmem:[#allocation5 + $0x3c8] sm:$0xff]
        %v436 = vld [vmem:[#allocation5 + $0x3d0] sm:$0xff]
        %v437 = vld [vmem:[#allocation5 + $0x3d8] sm:$0xff]
        %v438 = vld [vmem:[#allocation5 + $0x3e0] sm:$0xff]
        %v439 = vld [vmem:[#allocation5 + $0x3e8] sm:$0xff]
        %v440 = vld [vmem:[#allocation5 + $0x3f0] sm:$0xff]
        %v441 = vld [vmem:[#allocation5 + $0x3f8] sm:$0xff]
        %v442 = vld [vmem:[#allocation5 + $0x400] sm:$0xff]
        %v443 = vld [vmem:[#allocation5 + $0x408] sm:$0xff]
        %v444 = vld [vmem:[#allocation5 + $0x410] sm:$0xff]
        %v445 = vld [vmem:[#allocation5 + $0x418] sm:$0xff]
        %v446 = vld [vmem:[#allocation5 + $0x420] sm:$0xff]
        %v447 = vld [vmem:[#allocation5 + $0x428] sm:$0xff]
        %v448 = vld [vmem:[#allocation5 + $0x430] sm:$0xff]
        %v449 = vld [vmem:[#allocation5 + $0x438] sm:$0xff]
        %v450 = vld [vmem:[#allocation5 + $0x440] sm:$0xff]
        %v451 = vld [vmem:[#allocation5 + $0x448] sm:$0xff]
        %v452 = vld [vmem:[#allocation5 + $0x450] sm:$0xff]
        %v453 = vld [vmem:[#allocation5 + $0x458] sm:$0xff]
        %v454 = vld [vmem:[#allocation5 + $0x460] sm:$0xff]
        %v455 = vld [vmem:[#allocation5 + $0x468] sm:$0xff]
        %v456 = vld [vmem:[#allocation5 + $0x470] sm:$0xff]
        %v457 = vld [vmem:[#allocation5 + $0x478] sm:$0xff]
        %v458 = vld [vmem:[#allocation5 + $0x480] sm:$0xff]
        %v459 = vld [vmem:[#allocation5 + $0x488] sm:$0xff]
        %v460 = vld [vmem:[#allocation5 + $0x490] sm:$0xff]
        %v461 = vld [vmem:[#allocation5 + $0x498] sm:$0xff]
        %v462 = vld [vmem:[#allocation5 + $0x4a0] sm:$0xff]
        %v463 = vld [vmem:[#allocation5 + $0x4a8] sm:$0xff]
        %v464 = vld [vmem:[#allocation5 + $0x4b0] sm:$0xff]
        %v465 = vld [vmem:[#allocation5 + $0x4b8] sm:$0xff]
        %v466 = vld [vmem:[#allocation5 + $0x4c0] sm:$0xff]
        %v467 = vld [vmem:[#allocation5 + $0x4c8] sm:$0xff]
        %v468 = vld [vmem:[#allocation5 + $0x4d0] sm:$0xff]
        %v469 = vld [vmem:[#allocation5 + $0x4d8] sm:$0xff]
        %v470 = vld [vmem:[#allocation5 + $0x4e0] sm:$0xff]
        %v471 = vld [vmem:[#allocation5 + $0x4e8] sm:$0xff]
        %v472 = vld [vmem:[#allocation5 + $0x4f0] sm:$0xff]
        %v473 = vld [vmem:[#allocation5 + $0x4f8] sm:$0xff]
        %v474 = vld [vmem:[#allocation5 + $0x500] sm:$0xff]
        %v475 = vld [vmem:[#allocation5 + $0x508] sm:$0xff]
        %v476 = vld [vmem:[#allocation5 + $0x510] sm:$0xff]
        %v477 = vld [vmem:[#allocation5 + $0x518] sm:$0xff]
        %v478 = vld [vmem:[#allocation5 + $0x520] sm:$0xff]
        %v479 = vld [vmem:[#allocation5 + $0x528] sm:$0xff]
        %v480 = vld [vmem:[#allocation5 + $0x530] sm:$0xff]
        %v481 = vld [vmem:[#allocation5 + $0x538] sm:$0xff]
        %v482 = vld [vmem:[#allocation5 + $0x540] sm:$0xff]
        %v483 = vld [vmem:[#allocation5 + $0x548] sm:$0xff]
        %v484 = vld [vmem:[#allocation5 + $0x550] sm:$0xff]
        %v485 = vld [vmem:[#allocation5 + $0x558] sm:$0xff]
        %v486 = vld [vmem:[#allocation5 + $0x560] sm:$0xff]
        %v487 = vld [vmem:[#allocation5 + $0x568] sm:$0xff]
        %v488 = vld [vmem:[#allocation5 + $0x570] sm:$0xff]
        %v489 = vld [vmem:[#allocation5 + $0x578] sm:$0xff]
        %v490 = vld [vmem:[#allocation5 + $0x580] sm:$0xff]
        %v491 = vld [vmem:[#allocation5 + $0x588] sm:$0xff]
        %v492 = vld [vmem:[#allocation5 + $0x590] sm:$0xff]
        %v493 = vld [vmem:[#allocation5 + $0x598] sm:$0xff]
        %v494 = vld [vmem:[#allocation5 + $0x5a0] sm:$0xff]
        %v495 = vld [vmem:[#allocation5 + $0x5a8] sm:$0xff]
        %v496 = vld [vmem:[#allocation5 + $0x5b0] sm:$0xff]
        %v497 = vld [vmem:[#allocation5 + $0x5b8] sm:$0xff]
        %v498 = vld [vmem:[#allocation5 + $0x5c0] sm:$0xff]
        %v499 = vld [vmem:[#allocation5 + $0x5c8] sm:$0xff]
        %v500 = vld [vmem:[#allocation5 + $0x5d0] sm:$0xff]
        %v501 = vld [vmem:[#allocation5 + $0x5d8] sm:$0xff]
        %v502 = vld [vmem:[#allocation5 + $0x5e0] sm:$0xff]
        %v503 = vld [vmem:[#allocation5 + $0x5e8] sm:$0xff]
        %v504 = vld [vmem:[#allocation5 + $0x5f0] sm:$0xff]
        %v505 = vld [vmem:[#allocation5 + $0x5f8] sm:$0xff]
        %v506 = vld [vmem:[%s2] sm:$0x3f]
        %v508 = vlaneseq
        %v509 = vshrl.u32 %v508, 7
        %v510 = vsub.s32 0, %v509
        %v511 = vrot.slane %v506, %v510
        %v512 = vlaneseq
        %v513 = vshrl.u32 %v512, 7
        %v514 = vsub.s32 1, %v513
        %v515 = vrot.slane %v506, %v514
        %v516 = vlaneseq
        %v517 = vshrl.u32 %v516, 7
        %v518 = vsub.s32 2, %v517
        %v519 = vrot.slane %v506, %v518
        %v520 = vlaneseq
        %v521 = vshrl.u32 %v520, 7
        %v522 = vsub.s32 3, %v521
        %v523 = vrot.slane %v506, %v522
        %v524 = vlaneseq
        %v525 = vshrl.u32 %v524, 7
        %v526 = vsub.s32 4, %v525
        %v527 = vrot.slane %v506, %v526
        %v528 = vlaneseq
        %v529 = vshrl.u32 %v528, 7
        %v530 = vsub.s32 5, %v529
        %v531 = vrot.slane %v506, %v530
        %538 = vmatprep.subr.mxu0 %v315
        %539 = vmatpush1.msra.mxu0 %v314
        %540 = vmatprep.subr.mxu0 %v321
        %541 = vmatpush1.msra.mxu0 %v320
        %542 = vmatprep.subr.mxu0 %v327
        %543 = vmatpush1.msra.mxu0 %v326
        %544 = vmatprep.subr.mxu0 %v333
        %545 = vmatpush1.msra.mxu0 %v332
        %546 = vmatprep.subr.mxu0 %v339
        %547 = vmatpush1.msra.mxu0 %v338
        %548 = vmatprep.subr.mxu0 %v345
        %549 = vmatpush1.msra.mxu0 %v344
        %550 = vmatprep.subr.mxu0 %v351
        %551 = vmatpush1.msra.mxu0 %v350
        %552 = vmatprep.subr.mxu0 %v357
        %553 = vmatpush1.msra.mxu0 %v356
        %554 = vmatprep.subr.mxu0 %v363
        %555 = vmatpush1.msra.mxu0 %v362
        %556 = vmatprep.subr.mxu0 %v369
        %557 = vmatpush1.msra.mxu0 %v368
        %558 = vmatprep.subr.mxu0 %v375
        %559 = vmatpush1.msra.mxu0 %v374
        %560 = vmatprep.subr.mxu0 %v381
        %561 = vmatpush1.msra.mxu0 %v380
        %562 = vmatprep.subr.mxu0 %v387
        %563 = vmatpush1.msra.mxu0 %v386
        %564 = vmatprep.subr.mxu0 %v393
        %565 = vmatpush1.msra.mxu0 %v392
        %566 = vmatprep.subr.mxu0 %v399
        %567 = vmatpush1.msra.mxu0 %v398
        %568 = vmatprep.subr.mxu0 %v405
        %569 = vmatpush1.msra.mxu0 %v404
        %570 = vmatprep.subr.mxu0 %v411
        %571 = vmatpush1.msra.mxu0 %v410
        %572 = vmatprep.subr.mxu0 %v417
        %573 = vmatpush1.msra.mxu0 %v416
        %574 = vmatprep.subr.mxu0 %v423
        %575 = vmatpush1.msra.mxu0 %v422
        %576 = vmatprep.subr.mxu0 %v429
        %577 = vmatpush1.msra.mxu0 %v428
        %578 = vmatprep.subr.mxu0 %v435
        %579 = vmatpush1.msra.mxu0 %v434
        %580 = vmatprep.subr.mxu0 %v441
        %581 = vmatpush1.msra.mxu0 %v440
        %582 = vmatprep.subr.mxu0 %v447
        %583 = vmatpush1.msra.mxu0 %v446
        %584 = vmatprep.subr.mxu0 %v453
        %585 = vmatpush1.msra.mxu0 %v452
        %586 = vmatprep.subr.mxu0 %v459
        %587 = vmatpush1.msra.mxu0 %v458
        %588 = vmatprep.subr.mxu0 %v465
        %589 = vmatpush1.msra.mxu0 %v464
        %590 = vmatprep.subr.mxu0 %v471
        %591 = vmatpush1.msra.mxu0 %v470
        %592 = vmatprep.subr.mxu0 %v477
        %593 = vmatpush1.msra.mxu0 %v476
        %594 = vmatprep.subr.mxu0 %v483
        %595 = vmatpush1.msra.mxu0 %v482
        %596 = vmatprep.subr.mxu0 %v489
        %597 = vmatpush1.msra.mxu0 %v488
        %598 = vmatprep.subr.mxu0 %v495
        %599 = vmatpush1.msra.mxu0 %v494
        %600 = vmatprep.subr.mxu0 %v501
        %601 = vmatpush1.msra.mxu0 %v500
        %602 = vmatprep.mubr.f32.mxu0 %v311
        %603 = vmatmul.mubr.f32.gmra.mrb[0].mxu0 %v310
        %v604 = vpop.f32.mrb[0].mxu0
        %v605 = vadd.f32 %v511, %v604
        %v606 = vpop.f32.mrb[0].mxu0
        %v607 = vadd.f32 %v515, %v606
        %608 = vmatprep.mubr.f32.mxu0 %v313
        %609 = vmatmul.mubr.f32.gmra.mrb[0].mxu0 %v312
        %v610 = vpop.f32.mrb[0].mxu0
        %v611 = vadd.f32 %v511, %v610
        %v612 = vpop.f32.mrb[0].mxu0
        %v613 = vadd.f32 %v515, %v612
        %614 = vdwg.mxu0
        %615 = vmatprep.subr.mxu0 %v317
        %616 = vmatpush1.msra.mxu0 %v316
        %617 = vmatprep.subr.mxu0 %v323
        %618 = vmatpush1.msra.mxu0 %v322
        %619 = vmatprep.subr.mxu0 %v329
        %620 = vmatpush1.msra.mxu0 %v328
        %621 = vmatprep.subr.mxu0 %v335
        %622 = vmatpush1.msra.mxu0 %v334
        %623 = vmatprep.subr.mxu0 %v341
        %624 = vmatpush1.msra.mxu0 %v340
        %625 = vmatprep.subr.mxu0 %v347
        %626 = vmatpush1.msra.mxu0 %v346
        %627 = vmatprep.subr.mxu0 %v353
        %628 = vmatpush1.msra.mxu0 %v352
        %629 = vmatprep.subr.mxu0 %v359
        %630 = vmatpush1.msra.mxu0 %v358
        %631 = vmatprep.subr.mxu0 %v365
        %632 = vmatpush1.msra.mxu0 %v364
        %633 = vmatprep.subr.mxu0 %v371
        %634 = vmatpush1.msra.mxu0 %v370
        %635 = vmatprep.subr.mxu0 %v377
        %636 = vmatpush1.msra.mxu0 %v376
        %637 = vmatprep.subr.mxu0 %v383
        %638 = vmatpush1.msra.mxu0 %v382
        %639 = vmatprep.subr.mxu0 %v389
        %640 = vmatpush1.msra.mxu0 %v388
        %641 = vmatprep.subr.mxu0 %v395
        %642 = vmatpush1.msra.mxu0 %v394
        %643 = vmatprep.subr.mxu0 %v401
        %644 = vmatpush1.msra.mxu0 %v400
        %645 = vmatprep.subr.mxu0 %v407
        %646 = vmatpush1.msra.mxu0 %v406
        %647 = vmatprep.subr.mxu0 %v413
        %648 = vmatpush1.msra.mxu0 %v412
        %649 = vmatprep.subr.mxu0 %v419
        %650 = vmatpush1.msra.mxu0 %v418
        %651 = vmatprep.subr.mxu0 %v425
        %652 = vmatpush1.msra.mxu0 %v424
        %653 = vmatprep.subr.mxu0 %v431
        %654 = vmatpush1.msra.mxu0 %v430
        %655 = vmatprep.subr.mxu0 %v437
        %656 = vmatpush1.msra.mxu0 %v436
        %657 = vmatprep.subr.mxu0 %v443
        %658 = vmatpush1.msra.mxu0 %v442
        %659 = vmatprep.subr.mxu0 %v449
        %660 = vmatpush1.msra.mxu0 %v448
        %661 = vmatprep.subr.mxu0 %v455
        %662 = vmatpush1.msra.mxu0 %v454
        %663 = vmatprep.subr.mxu0 %v461
        %664 = vmatpush1.msra.mxu0 %v460
        %665 = vmatprep.subr.mxu0 %v467
        %666 = vmatpush1.msra.mxu0 %v466
        %667 = vmatprep.subr.mxu0 %v473
        %668 = vmatpush1.msra.mxu0 %v472
        %669 = vmatprep.subr.mxu0 %v479
        %670 = vmatpush1.msra.mxu0 %v478
        %671 = vmatprep.subr.mxu0 %v485
        %672 = vmatpush1.msra.mxu0 %v484
        %673 = vmatprep.subr.mxu0 %v491
        %674 = vmatpush1.msra.mxu0 %v490
        %675 = vmatprep.subr.mxu0 %v497
        %676 = vmatpush1.msra.mxu0 %v496
        %677 = vmatprep.subr.mxu0 %v503
        %678 = vmatpush1.msra.mxu0 %v502
        %679 = vmatprep.mubr.f32.mxu0 %v311
        %680 = vmatmul.mubr.f32.gmra.mrb[0].mxu0 %v310
        %v681 = vpop.f32.mrb[0].mxu0
        %v682 = vadd.f32 %v519, %v681
        %v683 = vpop.f32.mrb[0].mxu0
        %v684 = vadd.f32 %v523, %v683
        %685 = vmatprep.mubr.f32.mxu0 %v313
        %686 = vmatmul.mubr.f32.gmra.mrb[0].mxu0 %v312
        %v687 = vpop.f32.mrb[0].mxu0
        %v688 = vadd.f32 %v519, %v687
        %v689 = vpop.f32.mrb[0].mxu0
        %v690 = vadd.f32 %v523, %v689
        %691 = vdwg.mxu0
        %692 = vmatprep.subr.mxu0 %v319
        %693 = vmatpush1.msra.mxu0 %v318
        %694 = vmatprep.subr.mxu0 %v325
        %695 = vmatpush1.msra.mxu0 %v324
        %696 = vmatprep.subr.mxu0 %v331
        %697 = vmatpush1.msra.mxu0 %v330
        %698 = vmatprep.subr.mxu0 %v337
        %699 = vmatpush1.msra.mxu0 %v336
        %700 = vmatprep.subr.mxu0 %v343
        %701 = vmatpush1.msra.mxu0 %v342
        %702 = vmatprep.subr.mxu0 %v349
        %703 = vmatpush1.msra.mxu0 %v348
        %704 = vmatprep.subr.mxu0 %v355
        %705 = vmatpush1.msra.mxu0 %v354
        %706 = vmatprep.subr.mxu0 %v361
        %707 = vmatpush1.msra.mxu0 %v360
        %708 = vmatprep.subr.mxu0 %v367
        %709 = vmatpush1.msra.mxu0 %v366
        %710 = vmatprep.subr.mxu0 %v373
        %711 = vmatpush1.msra.mxu0 %v372
        %712 = vmatprep.subr.mxu0 %v379
        %713 = vmatpush1.msra.mxu0 %v378
        %714 = vmatprep.subr.mxu0 %v385
        %715 = vmatpush1.msra.mxu0 %v384
        %716 = vmatprep.subr.mxu0 %v391
        %717 = vmatpush1.msra.mxu0 %v390
        %718 = vmatprep.subr.mxu0 %v397
        %719 = vmatpush1.msra.mxu0 %v396
        %720 = vmatprep.subr.mxu0 %v403
        %721 = vmatpush1.msra.mxu0 %v402
        %722 = vmatprep.subr.mxu0 %v409
        %723 = vmatpush1.msra.mxu0 %v408
        %724 = vmatprep.subr.mxu0 %v415
        %725 = vmatpush1.msra.mxu0 %v414
        %726 = vmatprep.subr.mxu0 %v421
        %727 = vmatpush1.msra.mxu0 %v420
        %728 = vmatprep.subr.mxu0 %v427
        %729 = vmatpush1.msra.mxu0 %v426
        %730 = vmatprep.subr.mxu0 %v433
        %731 = vmatpush1.msra.mxu0 %v432
        %732 = vmatprep.subr.mxu0 %v439
        %733 = vmatpush1.msra.mxu0 %v438
        %734 = vmatprep.subr.mxu0 %v445
        %735 = vmatpush1.msra.mxu0 %v444
        %736 = vmatprep.subr.mxu0 %v451
        %737 = vmatpush1.msra.mxu0 %v450
        %738 = vmatprep.subr.mxu0 %v457
        %739 = vmatpush1.msra.mxu0 %v456
        %740 = vmatprep.subr.mxu0 %v463
        %741 = vmatpush1.msra.mxu0 %v462
        %742 = vmatprep.subr.mxu0 %v469
        %743 = vmatpush1.msra.mxu0 %v468
        %744 = vmatprep.subr.mxu0 %v475
        %745 = vmatpush1.msra.mxu0 %v474
        %746 = vmatprep.subr.mxu0 %v481
        %747 = vmatpush1.msra.mxu0 %v480
        %748 = vmatprep.subr.mxu0 %v487
        %749 = vmatpush1.msra.mxu0 %v486
        %750 = vmatprep.subr.mxu0 %v493
        %751 = vmatpush1.msra.mxu0 %v492
        %752 = vmatprep.subr.mxu0 %v499
        %753 = vmatpush1.msra.mxu0 %v498
        %754 = vmatprep.subr.mxu0 %v505
        %755 = vmatpush1.msra.mxu0 %v504
        %756 = vmatprep.mubr.f32.mxu0 %v311
        %757 = vmatmul.mubr.f32.gmra.mrb[0].mxu0 %v310
        %v758 = vpop.f32.mrb[0].mxu0
        %v759 = vadd.f32 %v527, %v758
        %v760 = vpop.f32.mrb[0].mxu0
        %v761 = vadd.f32 %v531, %v760
        %762 = vmatprep.mubr.f32.mxu0 %v313
        %763 = vmatmul.mubr.f32.gmra.mrb[0].mxu0 %v312
        %v764 = vpop.f32.mrb[0].mxu0
        %v765 = vadd.f32 %v527, %v764
        %v766 = vpop.f32.mrb[0].mxu0
        %v767 = vadd.f32 %v531, %v766
        %768 = vdwg.mxu0
        %769 = vmatprep.subr.mxu0 0.0
        %770 = vmatpush1.xpose.msra.mxu0 %v682
        %771 = vmatprep.subr.mxu0 0.0
        %772 = vmatpush1.xpose.msra.mxu0 %v688
        %773 = vmatprep.subr.mxu0 0.0
        %774 = vmatpush1.xpose.msra.mxu0 0.0
        %775 = vmatprep.subr.mxu0 0.0
        %776 = vmatpush1.xpose.msra.mxu0 0.0
        %777 = vmatprep.subr.mxu0 0.0
        %778 = vmatpush1.xpose.msra.mxu0 0.0
        %779 = vmatprep.subr.mxu0 0.0
        %780 = vmatpush1.xpose.msra.mxu0 0.0
        %781 = vmatprep.subr.mxu0 0.0
        %782 = vmatpush1.xpose.msra.mxu0 0.0
        %783 = vmatprep.subr.mxu0 0.0
        %784 = vmatpush1.xpose.msra.mxu0 0.0
        %785 = vmatprep.subr.mxu0 0.0
        %786 = vmatpush1.xpose.msra.mxu0 0.0
        %787 = vmatprep.subr.mxu0 0.0
        %788 = vmatpush1.xpose.msra.mxu0 0.0
        %789 = vmatprep.subr.mxu0 0.0
        %790 = vmatpush1.xpose.msra.mxu0 0.0
        %791 = vmatprep.subr.mxu0 0.0
        %792 = vmatpush1.xpose.msra.mxu0 0.0
        %793 = vmatprep.subr.mxu0 0.0
        %794 = vmatpush1.xpose.msra.mxu0 0.0
        %795 = vmatprep.subr.mxu0 0.0
        %796 = vmatpush1.xpose.msra.mxu0 0.0
        %797 = vmatprep.subr.mxu0 0.0
        %798 = vmatpush1.xpose.msra.mxu0 0.0
        %799 = vmatprep.subr.mxu0 0.0
        %800 = vmatpush1.xpose.msra.mxu0 0.0
        %801 = vmatprep.subr.mxu0 0.0
        %802 = vmatpush1.xpose.msra.mxu0 0.0
        %803 = vmatprep.subr.mxu0 0.0
        %804 = vmatpush1.xpose.msra.mxu0 0.0
        %805 = vmatprep.subr.mxu0 0.0
        %806 = vmatpush1.xpose.msra.mxu0 0.0
        %807 = vmatprep.subr.mxu0 0.0
        %808 = vmatpush1.xpose.msra.mxu0 0.0
        %809 = vmatprep.subr.mxu0 0.0
        %810 = vmatpush1.xpose.msra.mxu0 0.0
        %811 = vmatprep.subr.mxu0 0.0
        %812 = vmatpush1.xpose.msra.mxu0 0.0
        %813 = vmatprep.subr.mxu0 0.0
        %814 = vmatpush1.xpose.msra.mxu0 0.0
        %815 = vmatprep.subr.mxu0 0.0
        %816 = vmatpush1.xpose.msra.mxu0 0.0
        %817 = vmatprep.subr.mxu0 0.0
        %818 = vmatpush1.xpose.msra.mxu0 0.0
        %819 = vmatprep.subr.mxu0 0.0
        %820 = vmatpush1.xpose.msra.mxu0 0.0
        %821 = vmatprep.subr.mxu0 0.0
        %822 = vmatpush1.xpose.msra.mxu0 0.0
        %823 = vmatprep.subr.mxu0 0.0
        %824 = vmatpush1.xpose.msra.mxu0 0.0
        %825 = vmatprep.subr.mxu0 0.0
        %826 = vmatpush1.xpose.msra.mxu0 0.0
        %827 = vmatprep.subr.mxu0 0.0
        %828 = vmatpush1.xpose.msra.mxu0 0.0
        %829 = vmatprep.subr.mxu0 0.0
        %830 = vmatpush1.xpose.msra.mxu0 0.0
        %831 = vmatprep.subr.mxu0 0.0
        %832 = vmatpush1.xpose.msra.mxu0 0.0
        %833 = vmatprep.mubr.f32.mxu0 0.0
        %834 = vmatmul.mubr.f32.gmra.mrb[0].mxu0 %v605
        %v835 = vpop.f32.mrb[0].mxu0
        %v836 = vadd.f32 0.0, %v835
        %v837 = vpop.f32.mrb[0].mxu0
        %838 = vmatprep.mubr.f32.mxu0 0.0
        %839 = vmatmul.mubr.f32.gmra.mrb[0].mxu0 %v611
        %v840 = vpop.f32.mrb[0].mxu0
        %v841 = vadd.f32 0.0, %v840
        %v842 = vpop.f32.mrb[0].mxu0
        %843 = vdwg.mxu0
        %v844 = vmul.f32 %v836, 0.088388346
        %v845 = vmul.f32 %v841, 0.088388346
        %vm846 = vcmask 130048
        %v847 = vsel %vm846, %v844, -inf
        %848 = vmax.xlane.f32.xlu0 %v847
        %v849 = vpop.xlane.xlu0 %848
        %v850 = vsel %vm846, %v845, -inf
        %851 = vmax.xlane.f32.xlu0 %v850
        %v852 = vpop.xlane.xlu0 %851
        %v853 = vsub.f32 %v844, %v849
        %v854 = vsub.f32 %v845, %v852
        %v855 = vmul.f32 %v853, 1.442695
        %v856 = vpow.pop %v855
        %v857 = vmul.f32 %v854, 1.442695
        %v858 = vpow.pop %v857
        %v859 = vsel %vm846, %v856, 0.0
        %860 = vadd.xlane.f32.xlu0 %v859
        %v861 = vpop.xlane.xlu0 %860
        %v862 = vsel %vm846, %v858, 0.0
        %863 = vadd.xlane.f32.xlu0 %v862
        %v864 = vpop.xlane.xlu0 %863
        %v865 = vrcp.pop %v861
        %v866 = vrcp.pop %v864
        %v867 = vmul.f32 %v856, %v865
        %v868 = vmul.f32 %v858, %v866
        %869 = vst.msk [vmem:[%s309] sm:$0xff] %vm846, %v867
        %870 = vst.msk [vmem:[%s309 + $0x8] sm:$0xff] %vm846, %v868
        %v872 = vsel %vm846, %v867, 0
        %v875 = vsel %vm846, %v868, 0
        %877 = vmatprep.subr.mxu0 0.0
        %878 = vmatpush1.msra.mxu0 %v759
        %879 = vmatprep.subr.mxu0 0.0
        %880 = vmatpush1.msra.mxu0 %v765
        %881 = vmatprep.subr.mxu0 0.0
        %882 = vmatpush1.msra.mxu0 0.0
        %883 = vmatprep.subr.mxu0 0.0
        %884 = vmatpush1.msra.mxu0 0.0
        %885 = vmatprep.subr.mxu0 0.0
        %886 = vmatpush1.msra.mxu0 0.0
        %887 = vmatprep.subr.mxu0 0.0
        %888 = vmatpush1.msra.mxu0 0.0
        %889 = vmatprep.subr.mxu0 0.0
        %890 = vmatpush1.msra.mxu0 0.0
        %891 = vmatprep.subr.mxu0 0.0
        %892 = vmatpush1.msra.mxu0 0.0
        %893 = vmatprep.subr.mxu0 0.0
        %894 = vmatpush1.msra.mxu0 0.0
        %895 = vmatprep.subr.mxu0 0.0
        %896 = vmatpush1.msra.mxu0 0.0
        %897 = vmatprep.subr.mxu0 0.0
        %898 = vmatpush1.msra.mxu0 0.0
        %899 = vmatprep.subr.mxu0 0.0
        %900 = vmatpush1.msra.mxu0 0.0
        %901 = vmatprep.subr.mxu0 0.0
        %902 = vmatpush1.msra.mxu0 0.0
        %903 = vmatprep.subr.mxu0 0.0
        %904 = vmatpush1.msra.mxu0 0.0
        %905 = vmatprep.subr.mxu0 0.0
        %906 = vmatpush1.msra.mxu0 0.0
        %907 = vmatprep.subr.mxu0 0.0
        %908 = vmatpush1.msra.mxu0 0.0
        %909 = vmatprep.subr.mxu0 0.0
        %910 = vmatpush1.msra.mxu0 0.0
        %911 = vmatprep.subr.mxu0 0.0
        %912 = vmatpush1.msra.mxu0 0.0
        %913 = vmatprep.subr.mxu0 0.0
        %914 = vmatpush1.msra.mxu0 0.0
        %915 = vmatprep.subr.mxu0 0.0
        %916 = vmatpush1.msra.mxu0 0.0
        %917 = vmatprep.subr.mxu0 0.0
        %918 = vmatpush1.msra.mxu0 0.0
        %919 = vmatprep.subr.mxu0 0.0
        %920 = vmatpush1.msra.mxu0 0.0
        %921 = vmatprep.subr.mxu0 0.0
        %922 = vmatpush1.msra.mxu0 0.0
        %923 = vmatprep.subr.mxu0 0.0
        %924 = vmatpush1.msra.mxu0 0.0
        %925 = vmatprep.subr.mxu0 0.0
        %926 = vmatpush1.msra.mxu0 0.0
        %927 = vmatprep.subr.mxu0 0.0
        %928 = vmatpush1.msra.mxu0 0.0
        %929 = vmatprep.subr.mxu0 0.0
        %930 = vmatpush1.msra.mxu0 0.0
        %931 = vmatprep.subr.mxu0 0.0
        %932 = vmatpush1.msra.mxu0 0.0
        %933 = vmatprep.subr.mxu0 0.0
        %934 = vmatpush1.msra.mxu0 0.0
        %935 = vmatprep.subr.mxu0 0.0
        %936 = vmatpush1.msra.mxu0 0.0
        %937 = vmatprep.subr.mxu0 0.0
        %938 = vmatpush1.msra.mxu0 0.0
        %939 = vmatprep.subr.mxu0 0.0
        %940 = vmatpush1.msra.mxu0 0.0
        %941 = vmatprep.mubr.f32.mxu0 0.0
        %942 = vmatmul.mubr.f32.gmra.mrb[0].mxu0 %v872
        %v943 = vpop.f32.mrb[0].mxu0
        %v944 = vadd.f32 0.0, %v943
        %v945 = vpop.f32.mrb[0].mxu0
        %946 = vmatprep.mubr.f32.mxu0 0.0
        %947 = vmatmul.mubr.f32.gmra.mrb[0].mxu0 %v875
        %v948 = vpop.f32.mrb[0].mxu0
        %v949 = vadd.f32 0.0, %v948
        %v950 = vpop.f32.mrb[0].mxu0
        %951 = vdwg.mxu0
        %952 = vmatprep.subr.mxu0 0.0
        %953 = vmatpush1.xpose.msra.mxu0 %v684
        %954 = vmatprep.subr.mxu0 0.0
        %955 = vmatpush1.xpose.msra.mxu0 %v690
        %956 = vmatprep.subr.mxu0 0.0
        %957 = vmatpush1.xpose.msra.mxu0 0.0
        %958 = vmatprep.subr.mxu0 0.0
        %959 = vmatpush1.xpose.msra.mxu0 0.0
        %960 = vmatprep.subr.mxu0 0.0
        %961 = vmatpush1.xpose.msra.mxu0 0.0
        %962 = vmatprep.subr.mxu0 0.0
        %963 = vmatpush1.xpose.msra.mxu0 0.0
        %964 = vmatprep.subr.mxu0 0.0
        %965 = vmatpush1.xpose.msra.mxu0 0.0
        %966 = vmatprep.subr.mxu0 0.0
        %967 = vmatpush1.xpose.msra.mxu0 0.0
        %968 = vmatprep.subr.mxu0 0.0
        %969 = vmatpush1.xpose.msra.mxu0 0.0
        %970 = vmatprep.subr.mxu0 0.0
        %971 = vmatpush1.xpose.msra.mxu0 0.0
        %972 = vmatprep.subr.mxu0 0.0
        %973 = vmatpush1.xpose.msra.mxu0 0.0
        %974 = vmatprep.subr.mxu0 0.0
        %975 = vmatpush1.xpose.msra.mxu0 0.0
        %976 = vmatprep.subr.mxu0 0.0
        %977 = vmatpush1.xpose.msra.mxu0 0.0
        %978 = vmatprep.subr.mxu0 0.0
        %979 = vmatpush1.xpose.msra.mxu0 0.0
        %980 = vmatprep.subr.mxu0 0.0
        %981 = vmatpush1.xpose.msra.mxu0 0.0
        %982 = vmatprep.subr.mxu0 0.0
        %983 = vmatpush1.xpose.msra.mxu0 0.0
        %984 = vmatprep.subr.mxu0 0.0
        %985 = vmatpush1.xpose.msra.mxu0 0.0
        %986 = vmatprep.subr.mxu0 0.0
        %987 = vmatpush1.xpose.msra.mxu0 0.0
        %988 = vmatprep.subr.mxu0 0.0
        %989 = vmatpush1.xpose.msra.mxu0 0.0
        %990 = vmatprep.subr.mxu0 0.0
        %991 = vmatpush1.xpose.msra.mxu0 0.0
        %992 = vmatprep.subr.mxu0 0.0
        %993 = vmatpush1.xpose.msra.mxu0 0.0
        %994 = vmatprep.subr.mxu0 0.0
        %995 = vmatpush1.xpose.msra.mxu0 0.0
        %996 = vmatprep.subr.mxu0 0.0
        %997 = vmatpush1.xpose.msra.mxu0 0.0
        %998 = vmatprep.subr.mxu0 0.0
        %999 = vmatpush1.xpose.msra.mxu0 0.0
        %1000 = vmatprep.subr.mxu0 0.0
        %1001 = vmatpush1.xpose.msra.mxu0 0.0
        %1002 = vmatprep.subr.mxu0 0.0
        %1003 = vmatpush1.xpose.msra.mxu0 0.0
        %1004 = vmatprep.subr.mxu0 0.0
        %1005 = vmatpush1.xpose.msra.mxu0 0.0
        %1006 = vmatprep.subr.mxu0 0.0
        %1007 = vmatpush1.xpose.msra.mxu0 0.0
        %1008 = vmatprep.subr.mxu0 0.0
        %1009 = vmatpush1.xpose.msra.mxu0 0.0
        %1010 = vmatprep.subr.mxu0 0.0
        %1011 = vmatpush1.xpose.msra.mxu0 0.0
        %1012 = vmatprep.subr.mxu0 0.0
        %1013 = vmatpush1.xpose.msra.mxu0 0.0
        %1014 = vmatprep.subr.mxu0 0.0
        %1015 = vmatpush1.xpose.msra.mxu0 0.0
        %1016 = vmatprep.mubr.f32.mxu0 0.0
        %1017 = vmatmul.mubr.f32.gmra.mrb[0].mxu0 %v607
        %v1018 = vpop.f32.mrb[0].mxu0
        %v1019 = vadd.f32 0.0, %v1018
        %v1020 = vpop.f32.mrb[0].mxu0
        %1021 = vmatprep.mubr.f32.mxu0 0.0
        %1022 = vmatmul.mubr.f32.gmra.mrb[0].mxu0 %v613
        %v1023 = vpop.f32.mrb[0].mxu0
        %v1024 = vadd.f32 0.0, %v1023
        %v1025 = vpop.f32.mrb[0].mxu0
        %1026 = vdwg.mxu0
        %v1027 = vmul.f32 %v1019, 0.088388346
        %v1028 = vmul.f32 %v1024, 0.088388346
        %v1029 = vsel %vm846, %v1027, -inf
        %1030 = vmax.xlane.f32.xlu0 %v1029
        %v1031 = vpop.xlane.xlu0 %1030
        %v1032 = vsel %vm846, %v1028, -inf
        %1033 = vmax.xlane.f32.xlu0 %v1032
        %v1034 = vpop.xlane.xlu0 %1033
        %v1035 = vsub.f32 %v1027, %v1031
        %v1036 = vsub.f32 %v1028, %v1034
        %v1037 = vmul.f32 %v1035, 1.442695
        %v1038 = vpow.pop %v1037
        %v1039 = vmul.f32 %v1036, 1.442695
        %v1040 = vpow.pop %v1039
        %v1041 = vsel %vm846, %v1038, 0.0
        %1042 = vadd.xlane.f32.xlu0 %v1041
        %v1043 = vpop.xlane.xlu0 %1042
        %v1044 = vsel %vm846, %v1040, 0.0
        %1045 = vadd.xlane.f32.xlu0 %v1044
        %v1046 = vpop.xlane.xlu0 %1045
        %v1047 = vrcp.pop %v1043
        %v1048 = vrcp.pop %v1046
        %v1049 = vmul.f32 %v1038, %v1047
        %v1050 = vmul.f32 %v1040, %v1048
        %s1051 = scalar_lea.vmem %s309, 16 [#allocation9]
        %1052 = vst.msk [vmem:[%s1051] sm:$0xff] %vm846, %v1049
        %1053 = vst.msk [vmem:[%s1051 + $0x8] sm:$0xff] %vm846, %v1050
        %v1055 = vsel %vm846, %v1049, 0
        %v1058 = vsel %vm846, %v1050, 0
        %1060 = vmatprep.subr.mxu0 0.0
        %1061 = vmatpush1.msra.mxu0 %v761
        %1062 = vmatprep.subr.mxu0 0.0
        %1063 = vmatpush1.msra.mxu0 %v767
        %1064 = vmatprep.subr.mxu0 0.0
        %1065 = vmatpush1.msra.mxu0 0.0
        %1066 = vmatprep.subr.mxu0 0.0
        %1067 = vmatpush1.msra.mxu0 0.0
        %1068 = vmatprep.subr.mxu0 0.0
        %1069 = vmatpush1.msra.mxu0 0.0
        %1070 = vmatprep.subr.mxu0 0.0
        %1071 = vmatpush1.msra.mxu0 0.0
        %1072 = vmatprep.subr.mxu0 0.0
        %1073 = vmatpush1.msra.mxu0 0.0
        %1074 = vmatprep.subr.mxu0 0.0
        %1075 = vmatpush1.msra.mxu0 0.0
        %1076 = vmatprep.subr.mxu0 0.0
        %1077 = vmatpush1.msra.mxu0 0.0
        %1078 = vmatprep.subr.mxu0 0.0
        %1079 = vmatpush1.msra.mxu0 0.0
        %1080 = vmatprep.subr.mxu0 0.0
        %1081 = vmatpush1.msra.mxu0 0.0
        %1082 = vmatprep.subr.mxu0 0.0
        %1083 = vmatpush1.msra.mxu0 0.0
        %1084 = vmatprep.subr.mxu0 0.0
        %1085 = vmatpush1.msra.mxu0 0.0
        %1086 = vmatprep.subr.mxu0 0.0
        %1087 = vmatpush1.msra.mxu0 0.0
        %1088 = vmatprep.subr.mxu0 0.0
        %1089 = vmatpush1.msra.mxu0 0.0
        %1090 = vmatprep.subr.mxu0 0.0
        %1091 = vmatpush1.msra.mxu0 0.0
        %1092 = vmatprep.subr.mxu0 0.0
        %1093 = vmatpush1.msra.mxu0 0.0
        %1094 = vmatprep.subr.mxu0 0.0
        %1095 = vmatpush1.msra.mxu0 0.0
        %1096 = vmatprep.subr.mxu0 0.0
        %1097 = vmatpush1.msra.mxu0 0.0
        %1098 = vmatprep.subr.mxu0 0.0
        %1099 = vmatpush1.msra.mxu0 0.0
        %1100 = vmatprep.subr.mxu0 0.0
        %1101 = vmatpush1.msra.mxu0 0.0
        %1102 = vmatprep.subr.mxu0 0.0
        %1103 = vmatpush1.msra.mxu0 0.0
        %1104 = vmatprep.subr.mxu0 0.0
        %1105 = vmatpush1.msra.mxu0 0.0
        %1106 = vmatprep.subr.mxu0 0.0
        %1107 = vmatpush1.msra.mxu0 0.0
        %1108 = vmatprep.subr.mxu0 0.0
        %1109 = vmatpush1.msra.mxu0 0.0
        %1110 = vmatprep.subr.mxu0 0.0
        %1111 = vmatpush1.msra.mxu0 0.0
        %1112 = vmatprep.subr.mxu0 0.0
        %1113 = vmatpush1.msra.mxu0 0.0
        %1114 = vmatprep.subr.mxu0 0.0
        %1115 = vmatpush1.msra.mxu0 0.0
        %1116 = vmatprep.subr.mxu0 0.0
        %1117 = vmatpush1.msra.mxu0 0.0
        %1118 = vmatprep.subr.mxu0 0.0
        %1119 = vmatpush1.msra.mxu0 0.0
        %1120 = vmatprep.subr.mxu0 0.0
        %1121 = vmatpush1.msra.mxu0 0.0
        %1122 = vmatprep.subr.mxu0 0.0
        %1123 = vmatpush1.msra.mxu0 0.0
        %1124 = vmatprep.mubr.f32.mxu0 0.0
        %1125 = vmatmul.mubr.f32.gmra.mrb[0].mxu0 %v1055
        %v1126 = vpop.f32.mrb[0].mxu0
        %v1127 = vadd.f32 0.0, %v1126
        %v1128 = vpop.f32.mrb[0].mxu0
        %1129 = vmatprep.mubr.f32.mxu0 0.0
        %1130 = vmatmul.mubr.f32.gmra.mrb[0].mxu0 %v1058
        %v1131 = vpop.f32.mrb[0].mxu0
        %v1132 = vadd.f32 0.0, %v1131
        %v1133 = vpop.f32.mrb[0].mxu0
        %1134 = vdwg.mxu0
        %v1135 = vld [vmem:[#allocation7] sm:$0xff]
        %v1136 = vld [vmem:[#allocation7 + $0x8] sm:$0xff]
        %v1137 = vld [vmem:[#allocation7 + $0x10] sm:$0xff]
        %v1138 = vld [vmem:[#allocation7 + $0x18] sm:$0xff]
        %v1139 = vld [vmem:[#allocation7 + $0x20] sm:$0xff]
        %v1140 = vld [vmem:[#allocation7 + $0x28] sm:$0xff]
        %v1141 = vld [vmem:[#allocation7 + $0x30] sm:$0xff]
        %v1142 = vld [vmem:[#allocation7 + $0x38] sm:$0xff]
        %v1143 = vld [vmem:[#allocation7 + $0x40] sm:$0xff]
        %v1144 = vld [vmem:[#allocation7 + $0x48] sm:$0xff]
        %v1145 = vld [vmem:[#allocation7 + $0x50] sm:$0xff]
        %v1146 = vld [vmem:[#allocation7 + $0x58] sm:$0xff]
        %v1147 = vld [vmem:[#allocation7 + $0x60] sm:$0xff]
        %v1148 = vld [vmem:[#allocation7 + $0x68] sm:$0xff]
        %v1149 = vld [vmem:[#allocation7 + $0x70] sm:$0xff]
        %v1150 = vld [vmem:[#allocation7 + $0x78] sm:$0xff]
        %v1151 = vld [vmem:[#allocation7 + $0x80] sm:$0xff]
        %v1152 = vld [vmem:[#allocation7 + $0x88] sm:$0xff]
        %v1153 = vld [vmem:[#allocation7 + $0x90] sm:$0xff]
        %v1154 = vld [vmem:[#allocation7 + $0x98] sm:$0xff]
        %v1155 = vld [vmem:[#allocation7 + $0xa0] sm:$0xff]
        %v1156 = vld [vmem:[#allocation7 + $0xa8] sm:$0xff]
        %v1157 = vld [vmem:[#allocation7 + $0xb0] sm:$0xff]
        %v1158 = vld [vmem:[#allocation7 + $0xb8] sm:$0xff]
        %v1159 = vld [vmem:[#allocation7 + $0xc0] sm:$0xff]
        %v1160 = vld [vmem:[#allocation7 + $0xc8] sm:$0xff]
        %v1161 = vld [vmem:[#allocation7 + $0xd0] sm:$0xff]
        %v1162 = vld [vmem:[#allocation7 + $0xd8] sm:$0xff]
        %v1163 = vld [vmem:[#allocation7 + $0xe0] sm:$0xff]
        %v1164 = vld [vmem:[#allocation7 + $0xe8] sm:$0xff]
        %v1165 = vld [vmem:[#allocation7 + $0xf0] sm:$0xff]
        %v1166 = vld [vmem:[#allocation7 + $0xf8] sm:$0xff]
        %v1167 = vld [vmem:[#allocation7 + $0x100] sm:$0xff]
        %v1168 = vld [vmem:[#allocation7 + $0x108] sm:$0xff]
        %v1169 = vld [vmem:[#allocation7 + $0x110] sm:$0xff]
        %v1170 = vld [vmem:[#allocation7 + $0x118] sm:$0xff]
        %v1171 = vld [vmem:[#allocation7 + $0x120] sm:$0xff]
        %v1172 = vld [vmem:[#allocation7 + $0x128] sm:$0xff]
        %v1173 = vld [vmem:[#allocation7 + $0x130] sm:$0xff]
        %v1174 = vld [vmem:[#allocation7 + $0x138] sm:$0xff]
        %v1175 = vld [vmem:[#allocation7 + $0x140] sm:$0xff]
        %v1176 = vld [vmem:[#allocation7 + $0x148] sm:$0xff]
        %v1177 = vld [vmem:[#allocation7 + $0x150] sm:$0xff]
        %v1178 = vld [vmem:[#allocation7 + $0x158] sm:$0xff]
        %v1179 = vld [vmem:[#allocation7 + $0x160] sm:$0xff]
        %v1180 = vld [vmem:[#allocation7 + $0x168] sm:$0xff]
        %v1181 = vld [vmem:[#allocation7 + $0x170] sm:$0xff]
        %v1182 = vld [vmem:[#allocation7 + $0x178] sm:$0xff]
        %v1183 = vld [vmem:[#allocation7 + $0x180] sm:$0xff]
        %v1184 = vld [vmem:[#allocation7 + $0x188] sm:$0xff]
        %v1185 = vld [vmem:[#allocation7 + $0x190] sm:$0xff]
        %v1186 = vld [vmem:[#allocation7 + $0x198] sm:$0xff]
        %v1187 = vld [vmem:[#allocation7 + $0x1a0] sm:$0xff]
        %v1188 = vld [vmem:[#allocation7 + $0x1a8] sm:$0xff]
        %v1189 = vld [vmem:[#allocation7 + $0x1b0] sm:$0xff]
        %v1190 = vld [vmem:[#allocation7 + $0x1b8] sm:$0xff]
        %v1191 = vld [vmem:[#allocation7 + $0x1c0] sm:$0xff]
        %v1192 = vld [vmem:[#allocation7 + $0x1c8] sm:$0xff]
        %v1193 = vld [vmem:[#allocation7 + $0x1d0] sm:$0xff]
        %v1194 = vld [vmem:[#allocation7 + $0x1d8] sm:$0xff]
        %v1195 = vld [vmem:[#allocation7 + $0x1e0] sm:$0xff]
        %v1196 = vld [vmem:[#allocation7 + $0x1e8] sm:$0xff]
        %v1197 = vld [vmem:[#allocation7 + $0x1f0] sm:$0xff]
        %v1198 = vld [vmem:[#allocation7 + $0x1f8] sm:$0xff]
        %v1199 = vld [vmem:[%s4] sm:$0x3]
        %v1201 = vlaneseq
        %v1202 = vshrl.u32 %v1201, 7
        %v1203 = vsub.s32 0, %v1202
        %v1204 = vrot.slane %v1199, %v1203
        %v1205 = vlaneseq
        %v1206 = vshrl.u32 %v1205, 7
        %v1207 = vsub.s32 1, %v1206
        %v1208 = vrot.slane %v1199, %v1207
        %1211 = vmatprep.subr.mxu0 %v1136
        %1212 = vmatpush1.msra.mxu0 %v1135
        %1213 = vmatprep.subr.mxu0 %v1138
        %1214 = vmatpush1.msra.mxu0 %v1137
        %1215 = vmatprep.subr.mxu0 %v1140
        %1216 = vmatpush1.msra.mxu0 %v1139
        %1217 = vmatprep.subr.mxu0 %v1142
        %1218 = vmatpush1.msra.mxu0 %v1141
        %1219 = vmatprep.subr.mxu0 %v1144
        %1220 = vmatpush1.msra.mxu0 %v1143
        %1221 = vmatprep.subr.mxu0 %v1146
        %1222 = vmatpush1.msra.mxu0 %v1145
        %1223 = vmatprep.subr.mxu0 %v1148
        %1224 = vmatpush1.msra.mxu0 %v1147
        %1225 = vmatprep.subr.mxu0 %v1150
        %1226 = vmatpush1.msra.mxu0 %v1149
        %1227 = vmatprep.subr.mxu0 %v1152
        %1228 = vmatpush1.msra.mxu0 %v1151
        %1229 = vmatprep.subr.mxu0 %v1154
        %1230 = vmatpush1.msra.mxu0 %v1153
        %1231 = vmatprep.subr.mxu0 %v1156
        %1232 = vmatpush1.msra.mxu0 %v1155
        %1233 = vmatprep.subr.mxu0 %v1158
        %1234 = vmatpush1.msra.mxu0 %v1157
        %1235 = vmatprep.subr.mxu0 %v1160
        %1236 = vmatpush1.msra.mxu0 %v1159
        %1237 = vmatprep.subr.mxu0 %v1162
        %1238 = vmatpush1.msra.mxu0 %v1161
        %1239 = vmatprep.subr.mxu0 %v1164
        %1240 = vmatpush1.msra.mxu0 %v1163
        %1241 = vmatprep.subr.mxu0 %v1166
        %1242 = vmatpush1.msra.mxu0 %v1165
        %1243 = vmatprep.subr.mxu0 %v1168
        %1244 = vmatpush1.msra.mxu0 %v1167
        %1245 = vmatprep.subr.mxu0 %v1170
        %1246 = vmatpush1.msra.mxu0 %v1169
        %1247 = vmatprep.subr.mxu0 %v1172
        %1248 = vmatpush1.msra.mxu0 %v1171
        %1249 = vmatprep.subr.mxu0 %v1174
        %1250 = vmatpush1.msra.mxu0 %v1173
        %1251 = vmatprep.subr.mxu0 %v1176
        %1252 = vmatpush1.msra.mxu0 %v1175
        %1253 = vmatprep.subr.mxu0 %v1178
        %1254 = vmatpush1.msra.mxu0 %v1177
        %1255 = vmatprep.subr.mxu0 %v1180
        %1256 = vmatpush1.msra.mxu0 %v1179
        %1257 = vmatprep.subr.mxu0 %v1182
        %1258 = vmatpush1.msra.mxu0 %v1181
        %1259 = vmatprep.subr.mxu0 %v1184
        %1260 = vmatpush1.msra.mxu0 %v1183
        %1261 = vmatprep.subr.mxu0 %v1186
        %1262 = vmatpush1.msra.mxu0 %v1185
        %1263 = vmatprep.subr.mxu0 %v1188
        %1264 = vmatpush1.msra.mxu0 %v1187
        %1265 = vmatprep.subr.mxu0 %v1190
        %1266 = vmatpush1.msra.mxu0 %v1189
        %1267 = vmatprep.subr.mxu0 %v1192
        %1268 = vmatpush1.msra.mxu0 %v1191
        %1269 = vmatprep.subr.mxu0 %v1194
        %1270 = vmatpush1.msra.mxu0 %v1193
        %1271 = vmatprep.subr.mxu0 %v1196
        %1272 = vmatpush1.msra.mxu0 %v1195
        %1273 = vmatprep.subr.mxu0 %v1198
        %1274 = vmatpush1.msra.mxu0 %v1197
        %1275 = vmatprep.mubr.f32.mxu0 %v1127
        %1276 = vmatmul.mubr.f32.gmra.mrb[0].mxu0 %v944
        %v1277 = vpop.f32.mrb[0].mxu0
        %v1278 = vadd.f32 %v1204, %v1277
        %v1279 = vpop.f32.mrb[0].mxu0
        %v1280 = vadd.f32 %v1208, %v1279
        %1281 = vmatprep.mubr.f32.mxu0 %v1132
        %1282 = vmatmul.mubr.f32.gmra.mrb[0].mxu0 %v949
        %v1283 = vpop.f32.mrb[0].mxu0
        %v1284 = vadd.f32 %v1204, %v1283
        %v1285 = vpop.f32.mrb[0].mxu0
        %v1286 = vadd.f32 %v1208, %v1285
        %1287 = vdwg.mxu0
        %1288 = vst [vmem:[%s302] sm:$0xff] %v1278
        %1289 = vst [vmem:[%s302 + $0x8] sm:$0xff] %v1280
        %1290 = vst [vmem:[%s302 + $0x10] sm:$0xff] %v1284
        %1291 = vst [vmem:[%s302 + $0x18] sm:$0xff] %v1286
        %s1292 = sand.u32 %s146, 1
        %s1293 = scalar_lea.sflag [#allocation4], %s1292
        %s1294 = sand.u32 %s146, 1
        %s1295 = smul.addr %s1294, 32
        %s1296 = scalar_lea.vmem [#allocation8], %s1295
        %s1297 = sand.u32 %s172, 1
        %s1298 = scalar_lea.sflag [#allocation10], %s1297
        %s1299 = sand.u32 %s172, 1
        %s1300 = smul.addr %s1299, 32
        %s1301 = scalar_lea.vmem [#allocation9], %s1300
        // Predicated region
        $region53: #{tpu_custom_call.1} parent=39 // pred_check
          %p1302 = pneg %p156
        $region54: #{tpu_custom_call.1} parent=39 // pred_check_branch
          %1304 = sbr.rel (%p1302) target = $region56
        $region55: #{tpu_custom_call.1} parent=39 // pred_region
          %s1306 = ssub.s32 512, 512
          %1307 = vsyncadd %s1293, %s1306
          %s1308 = smul.addr %s28, 4
          %s1309 = smul.addr %s1308, 128
          %s1310 = scalar_lea.hbm %s5, %s1309
          %s1311 = sshll.u32 %s1296, 4
          %s1312 = int_to_ptr.vmem [resolvable:$true] %s1311
          %1317 = dma.vmem_to_hbm [thread:$0]  %s1312, 512, %s1310, %s1293, 256, 256, 16
        $region56: #{tpu_custom_call.1} parent=39 // pred_fallthru
          _
        // Predicated region
        $region57: #{tpu_custom_call.1} parent=39 // pred_check
          %p1318 = pneg %p182
        $region58: #{tpu_custom_call.1} parent=39 // pred_check_branch
          %1320 = sbr.rel (%p1318) target = $region60
        $region59: #{tpu_custom_call.1} parent=39 // pred_region
          %s1322 = ssub.s32 512, 512
          %1323 = vsyncadd %s1298, %s1322
          %s1324 = smul.addr %s28, 4
          %s1325 = smul.addr %s1324, 128
          %s1326 = scalar_lea.hbm %s6, %s1325
          %s1327 = sshll.u32 %s1301, 4
          %s1328 = int_to_ptr.vmem [resolvable:$true] %s1327
          %1333 = dma.vmem_to_hbm [thread:$0]  %s1328, 512, %s1326, %s1298, 128, 128, 8
        $region60: #{tpu_custom_call.1} parent=39 // pred_fallthru
          _
      $region40: #{tpu_custom_call.1} parent=5 // pred_fallthru
        _
      %p1334 = scmp.le.s32.totalorder 2, %s23
      // Predicated region
      $region61: #{tpu_custom_call.1} parent=5 // pred_check
        %p1335 = pneg %p1334
      $region62: #{tpu_custom_call.1} parent=5 // pred_check_branch
        %1337 = sbr.rel (%p1335) target = $region64
      $region63: #{tpu_custom_call.1} parent=5 // pred_region
        %s1338 = ssub.s32 %s23, 2
        // Predicated region
        $region65: #{tpu_custom_call.1} parent=63 // pred_check
          %p1339 = pneg %p162
        $region66: #{tpu_custom_call.1} parent=63 // pred_check_branch
          %1341 = sbr.rel (%p1339) target = $region68
        $region67: #{tpu_custom_call.1} parent=63 // pred_region
          %s1342 = sand.u32 %s147, 1
          %s1343 = scalar_lea.sflag [#allocation4], %s1342
          %s1344 = sand.u32 %s147, 1
          %s1345 = smul.addr %s1344, 32
          %s1346 = scalar_lea.vmem [#allocation8], %s1345
          %1347 = dma.done %s1343, 512
        $region68: #{tpu_custom_call.1} parent=63 // pred_fallthru
          _
        // Predicated region
        $region69: #{tpu_custom_call.1} parent=63 // pred_check
          %p1348 = pneg %p188
        $region70: #{tpu_custom_call.1} parent=63 // pred_check_branch
          %1350 = sbr.rel (%p1348) target = $region72
        $region71: #{tpu_custom_call.1} parent=63 // pred_region
          %s1351 = sand.u32 %s173, 1
          %s1352 = scalar_lea.sflag [#allocation10], %s1351
          %s1353 = sand.u32 %s173, 1
          %s1354 = smul.addr %s1353, 32
          %s1355 = scalar_lea.vmem [#allocation9], %s1354
          %1356 = dma.done %s1352, 512
        $region72: #{tpu_custom_call.1} parent=63 // pred_fallthru
          _
      $region64: #{tpu_custom_call.1} parent=5 // pred_fallthru
        _
    $region6: #{tpu_custom_call.1} parent=1 // loop_footer
      %s27 = sadd.s32 1, %s23
    $region7: #{tpu_custom_call.1} parent=1 // loop_footer_branch
      %22 = sbr.rel target = $region3
    $region8: #{tpu_custom_call.1} parent=1 // loop_exit
      _
    %1357 = vsyncpa [#allocation3], 1
    %s1358 = scalar_lea.sflag [#allocation3], 1
    %1359 = vsyncpa %s1358, 1
    %1360 = vsyncpa [#allocation6], 1
    %1361 = vsyncpa [#allocation4], 1
    %s1362 = scalar_lea.sflag [#allocation4], 1
    %1363 = vsyncpa %s1362, 1
    %1364 = vsyncpa [#allocation10], 1
    %s1365 = scalar_lea.sflag [#allocation10], 1
    %1366 = vsyncpa %s1365, 1

</llo_original>
